<compile_context>
chip_gen: v7x
topology: tpu7x:2x2x1
jax: 0.10.0
libtpu: 0.0.40
codegen_flags: <defaults>
</compile_context>

<pallas_src>
import functools

import jax
import jax.numpy as jnp
import numpy as np
from jax.experimental import pallas as pl
from jax.experimental.pallas import tpu as pltpu


def row_encoder_kernel(x_ref, wbig_ref, bbig_ref, epd_ref, wo_ref, bo_ref,
                       mmat_ref, ln1w_ref, ln1b_ref, w1_ref, b1_ref,
                       w2_ref, b2_ref, ln2w_ref, ln2b_ref, wlin_ref, blin_ref,
                       o_ref, *, n_cols, nheads, head_dim, eps=1e-5):
    f32 = jnp.float32
    bf16 = jnp.bfloat16

    x_bf = x_ref[...]                                # bf16 [bn, C*D]
    x = x_bf.astype(f32)
    bn, cd = x.shape
    score_w = n_cols * n_cols * nheads               # score lanes, order (i, h, j)
    hw = head_dim * score_w                          # width of qa / kb blocks

    def mm(a, b):
        # bf16 MXU operands, f32 accumulation.
        return jnp.dot(a.astype(bf16), b, preferred_element_type=f32)

    def tree_sum_chunks(t, width, n):
        chunks = [t[:, i * width:(i + 1) * width] for i in range(n)]
        while len(chunks) > 1:
            nxt = [chunks[i] + chunks[i + 1] for i in range(0, len(chunks) - 1, 2)]
            if len(chunks) % 2:
                nxt.append(chunks[-1])
            chunks = nxt
        return chunks[0]

    # ---- fused projection with folded expansions --------------------------------
    # wbig = [blockdiag(Wq)@eq * 1/sqrt(hd) | blockdiag(Wk)@ek | blockdiag(Wv)@ev]
    # so proj directly contains the (d,i,h,j)-expanded, pre-scaled q, the expanded
    # k, and the (j,i,h,d)-expanded v.
    proj = mm(x_bf, wbig_ref[...]) + bbig_ref[...]   # [bn, 2*hw + C*CD]
    qa = proj[:, :hw]
    kb = proj[:, hw:2 * hw]
    vexp = proj[:, 2 * hw:]

    # ---- block-diagonal attention scores (lanes ordered (i,h,j)) -----------------
    s = tree_sum_chunks(qa * kb, score_w, head_dim)  # already scaled by 1/sqrt(hd)

    # Softmax over j (groups of C adjacent lanes).  Subtracting the per-row GLOBAL
    # max is exact (constant across j for every (i,h)); the denominator is clamped
    # below so a group whose exps all underflow cannot produce Inf/NaN.
    s = s - jnp.max(s, axis=-1, keepdims=True)
    p = jnp.exp(s)

    # ---- unnormalized context + denominator from a single matmul -----------------
    # epd = [ep | dmat2]: first C*CD cols expand p to (j,i,h,d) (bcast over d), the
    # last CD cols sum p over j per (i,h) (bcast over d).
    pexp = mm(p, epd_ref[...])                       # [bn, C*CD + CD]
    cprod = pexp[:, :n_cols * cd] * vexp
    ctx = tree_sum_chunks(cprod, cd, n_cols)         # [bn, CD], (i,h,d) layout
    denom = jnp.maximum(pexp[:, n_cols * cd:], 1e-30)
    ctx = ctx * pl.reciprocal(denom, approx=True)

    attn = mm(ctx, wo_ref[...]) + bo_ref[...]        # fused out-projection

    # ---- post-norm transformer encoder layer -------------------------------------
    mmat = mmat_ref[...]                             # per-token mean operator (bf16)

    def layer_norm(z, w, b):
        mu = mm(z, mmat)                             # E[z]   (independent matmuls,
        ms = mm(z * z, mmat)                         # E[z^2]  no serial chain)
        var = jnp.maximum(ms - mu * mu, 0.0)         # biased variance
        return (z - mu) * jax.lax.rsqrt(var + eps) * w + b

    y1 = layer_norm(x + attn, ln1w_ref[...], ln1b_ref[...])
    ff = jnp.maximum(mm(y1, w1_ref[...]) + b1_ref[...], 0.0)    # ReLU
    ff = mm(ff, w2_ref[...]) + b2_ref[...]
    y2 = layer_norm(y1 + ff, ln2w_ref[...], ln2b_ref[...])

    # ---- final linear over the concatenated columns (lane-dense padded H) --------
    o_ref[...] = (mm(y2, wlin_ref[...]) + blin_ref[...]).astype(o_ref.dtype)


@functools.lru_cache(maxsize=None)
def _attention_constants(n_cols, d_model, nheads):
    """Fixed 0/1 rearrangement operators; depend only on the static config."""
    C, D = n_cols, d_model
    hd = D // nheads
    CD = C * D
    score_w = C * C * nheads

    eq = np.zeros((CD, hd * score_w), np.float32)    # q -> (d,i,h,j), bcast over j
    ek = np.zeros((CD, hd * score_w), np.float32)    # k -> (d,i,h,j), bcast over i
    ep = np.zeros((score_w, C * CD), np.float32)     # p -> (j,i,h,d), bcast over d
    ev = np.zeros((CD, C * CD), np.float32)          # v -> (j,i,h,d), bcast over i
    dmat2 = np.zeros((score_w, CD), np.float32)      # sum over j -> (i,h,d)
    for i in range(C):
        for j in range(C):
            for h in range(nheads):
                p_lane = i * (nheads * C) + h * C + j
                for d in range(hd):
                    s_lane = d * score_w + p_lane
                    c_lane = j * CD + i * D + h * hd + d
                    eq[i * D + h * hd + d, s_lane] = 1.0
                    ek[j * D + h * hd + d, s_lane] = 1.0
                    ep[p_lane, c_lane] = 1.0
                    ev[j * D + h * hd + d, c_lane] = 1.0
                    dmat2[p_lane, i * D + h * hd + d] = 1.0

    # Per-token mean operator, result already broadcast over the token's D features.
    mmat = np.kron(np.eye(C, dtype=np.float32),
                   np.full((D, D), 1.0 / D, np.float32))
    return eq, ek, ep, ev, dmat2, mmat


@functools.partial(jax.jit, static_argnames=("n_cols", "nheads", "block_rows"))
def row_encoder_forward(input_ids, params, *, n_cols, nheads, block_rows=512):
    B, S, C = input_ids.shape
    assert C == n_cols
    emb = params["embedding"]
    _, D = emb.shape
    assert D % nheads == 0
    head_dim = D // nheads
    CD = C * D
    H = params["lin_b"].shape[0]
    Hp = ((H + 127) // 128) * 128                    # lane-dense output width
    N = B * S
    bn = min(block_rows, N)
    assert N % bn == 0 and bn % 8 == 0

    f32, bf16 = jnp.float32, jnp.bfloat16

    # Embedding lookup (gather) stays in plain JAX; one table row per array row.
    x_row = jnp.take(emb, input_ids.reshape(-1), axis=0).astype(bf16)
    x_row = x_row.reshape(N, CD)

    eq, ek, ep, ev, dmat2, mmat = _attention_constants(n_cols, int(D), nheads)

    eyeC = jnp.eye(C, dtype=f32)

    def blockdiag(w):                                # w: [out, in] (torch layout)
        return jnp.kron(eyeC, w.T.astype(f32))

    def tile_row(b):
        return jnp.tile(b.astype(f32), C).reshape(1, -1)

    scale = 1.0 / float(head_dim) ** 0.5
    Wq, Wk, Wv = jnp.split(params["in_proj_w"], 3, axis=0)
    bq, bk, bv = jnp.split(params["in_proj_b"], 3, axis=0)

    eq_j, ek_j, ev_j = jnp.asarray(eq), jnp.asarray(ek), jnp.asarray(ev)
    # Fold expansion operators, biases and the score scale into the QKV weights.
    wq_exp = (blockdiag(Wq) @ eq_j) * scale
    wk_exp = blockdiag(Wk) @ ek_j
    wv_exp = blockdiag(Wv) @ ev_j
    bq_exp = (tile_row(bq) @ eq_j) * scale
    bk_exp = tile_row(bk) @ ek_j
    bv_exp = tile_row(bv) @ ev_j
    wbig = jnp.concatenate([wq_exp, wk_exp, wv_exp], axis=1).astype(bf16)
    bbig = jnp.concatenate([bq_exp, bk_exp, bv_exp], axis=1)

    epd = jnp.concatenate([jnp.asarray(ep), jnp.asarray(dmat2)], axis=1).astype(bf16)

    wo = blockdiag(params["out_proj_w"]).astype(bf16)
    bo = tile_row(params["out_proj_b"])
    w1 = blockdiag(params["ff1_w"]).astype(bf16)
    b1 = tile_row(params["ff1_b"])
    w2 = blockdiag(params["ff2_w"]).astype(bf16)
    b2 = tile_row(params["ff2_b"])
    ln1w, ln1b = tile_row(params["ln1_w"]), tile_row(params["ln1_b"])
    ln2w, ln2b = tile_row(params["ln2_w"]), tile_row(params["ln2_b"])
    wlin = jnp.zeros((CD, Hp), f32).at[:, :H].set(
        params["lin_w"].T.astype(f32)).astype(bf16)
    blin = jnp.zeros((1, Hp), f32).at[:, :H].set(params["lin_b"].astype(f32))
    mmat_j = jnp.asarray(mmat).astype(bf16)          # 1/D values are exact in bf16

    weights = [wbig, bbig, epd, wo, bo, mmat_j, ln1w, ln1b,
               w1, b1, w2, b2, ln2w, ln2b, wlin, blin]

    def _const_spec(a):
        return pl.BlockSpec(a.shape, lambda i: (0, 0))

    kernel = functools.partial(row_encoder_kernel, n_cols=n_cols,
                               nheads=nheads, head_dim=head_dim)

    out = pl.pallas_call(
        kernel,
        out_shape=jax.ShapeDtypeStruct((N, Hp), jnp.float32),
        grid_spec=pltpu.PrefetchScalarGridSpec(
            num_scalar_prefetch=0,
            grid=(N // bn,),
            in_specs=[pl.BlockSpec((bn, CD), lambda i: (i, 0))]
                     + [_const_spec(w) for w in weights],
            out_specs=pl.BlockSpec((bn, Hp), lambda i: (i, 0)),
        ),
        compiler_params=pltpu.CompilerParams(
            dimension_semantics=("parallel",),
            vmem_limit_bytes=48 * 1024 * 1024,
        ),
    )(x_row, *weights)
    return out[:, :H].reshape(B, S, H)


def reference_forward(input_ids, params, *, n_cols, nheads):
    """Plain-JAX f32 reference matching the PyTorch forward (eval mode)."""
    emb = params["embedding"]
    _, D = emb.shape
    hd = D // nheads
    B, S, C = input_ids.shape
    N = B * S
    x = jnp.take(emb, input_ids.reshape(-1), axis=0).reshape(N, C, D)

    Wq, Wk, Wv = jnp.split(params["in_proj_w"], 3, axis=0)
    bq, bk, bv = jnp.split(params["in_proj_b"], 3, axis=0)
    q = x @ Wq.T + bq
    k = x @ Wk.T + bk
    v = x @ Wv.T + bv

    def split_heads(t):
        return t.reshape(N, C, nheads, hd).transpose(0, 2, 1, 3)

    q, k, v = split_heads(q), split_heads(k), split_heads(v)
    s = jnp.einsum("nhqe,nhke->nhqk", q, k) / (hd ** 0.5)
    p = jax.nn.softmax(s, axis=-1)
    ctx = jnp.einsum("nhqk,nhke->nhqe", p, v).transpose(0, 2, 1, 3).reshape(N, C, D)
    attn = ctx @ params["out_proj_w"].T + params["out_proj_b"]

    def ln(z, w, b):
        mu = z.mean(-1, keepdims=True)
        var = ((z - mu) ** 2).mean(-1, keepdims=True)
        return (z - mu) / jnp.sqrt(var + 1e-5) * w + b

    y1 = ln(x + attn, params["ln1_w"], params["ln1_b"])
    ff = jax.nn.relu(y1 @ params["ff1_w"].T + params["ff1_b"])
    ff = ff @ params["ff2_w"].T + params["ff2_b"]
    y2 = ln(y1 + ff, params["ln2_w"], params["ln2_b"])
    out = y2.reshape(B, S, C * D) @ params["lin_w"].T + params["lin_b"]
    return out


def init_params(key, n_cols, vocab_size, hidden_size, col_hidden_size):
    D = col_hidden_size
    ks = jax.random.split(key, 10)

    def nrm(k, shape, scale=0.1):
        return (scale * jax.random.normal(k, shape)).astype(jnp.float32)

    return {
        "embedding": nrm(ks[0], (vocab_size, D), 1.0),
        "in_proj_w": nrm(ks[1], (3 * D, D)),
        "in_proj_b": nrm(ks[2], (3 * D,)),
        "out_proj_w": nrm(ks[3], (D, D)),
        "out_proj_b": nrm(ks[4], (D,)),
        "ln1_w": jnp.ones((D,), jnp.float32),
        "ln1_b": jnp.zeros((D,), jnp.float32),
        "ff1_w": nrm(ks[5], (D, D)),        # dim_feedforward = col_hidden_size
        "ff1_b": nrm(ks[6], (D,)),
        "ff2_w": nrm(ks[7], (D, D)),
        "ff2_b": jnp.zeros((D,), jnp.float32),
        "ln2_w": jnp.ones((D,), jnp.float32),
        "ln2_b": jnp.zeros((D,), jnp.float32),
        "lin_w": nrm(ks[8], (hidden_size, D * n_cols)),
        "lin_b": nrm(ks[9], (hidden_size,)),
    }


if __name__ == "__main__":
    n_cols, vocab_size, hidden_size, col_hidden_size, nheads = 4, 32, 32, 32, 8

    key = jax.random.PRNGKey(0)
    kp, kx1, kx2 = jax.random.split(key, 3)
    params = init_params(kp, n_cols, vocab_size, hidden_size, col_hidden_size)

    # Tolerances account for bf16 MXU operands (f32 accumulation) + approx recip.
    RTOL = ATOL = 3e-2

    # Small demo shape (matches the module defaults): B=2, S=8.
    B, S = 2, 8
    ids_small = jax.random.randint(kx1, (B, S, n_cols), 0, vocab_size,
                                   dtype=jnp.int32)
    out = jax.block_until_ready(
        row_encoder_forward(ids_small, params, n_cols=n_cols, nheads=nheads,
                            block_rows=8))
    ref = reference_forward(ids_small, params, n_cols=n_cols, nheads=nheads)
    np.testing.assert_allclose(np.asarray(out), np.asarray(ref),
                               rtol=RTOL, atol=ATOL)

    # Larger run exercising the tuned operating point (8 grid steps of 512 rows).
    B2, S2 = 8, 512
    ids_big = jax.random.randint(kx2, (B2, S2, n_cols), 0, vocab_size,
                                 dtype=jnp.int32)
    out_big = jax.block_until_ready(
        row_encoder_forward(ids_big, params, n_cols=n_cols, nheads=nheads,
                            block_rows=512))
    ref_big = reference_forward(ids_big, params, n_cols=n_cols, nheads=nheads)
    np.testing.assert_allclose(np.asarray(out_big), np.asarray(ref_big),
                               rtol=RTOL, atol=ATOL)
    print("KERNEL_OK")
</pallas_src>

<mosaic_0001>
module attributes {stable_mosaic.version = 11 : i64} {
  func.func @row_encoder_kernel(%arg0: i32, %arg1: memref<8x128xbf16, #tpu.memory_space<vmem>>, %arg2: memref<128x1536xbf16, #tpu.memory_space<vmem>>, %arg3: memref<1x1536xf32, #tpu.memory_space<vmem>>, %arg4: memref<128x640xbf16, #tpu.memory_space<vmem>>, %arg5: memref<128x128xbf16, #tpu.memory_space<vmem>>, %arg6: memref<1x128xf32, #tpu.memory_space<vmem>>, %arg7: memref<128x128xbf16, #tpu.memory_space<vmem>>, %arg8: memref<1x128xf32, #tpu.memory_space<vmem>>, %arg9: memref<1x128xf32, #tpu.memory_space<vmem>>, %arg10: memref<128x128xbf16, #tpu.memory_space<vmem>>, %arg11: memref<1x128xf32, #tpu.memory_space<vmem>>, %arg12: memref<128x128xbf16, #tpu.memory_space<vmem>>, %arg13: memref<1x128xf32, #tpu.memory_space<vmem>>, %arg14: memref<1x128xf32, #tpu.memory_space<vmem>>, %arg15: memref<1x128xf32, #tpu.memory_space<vmem>>, %arg16: memref<128x128xbf16, #tpu.memory_space<vmem>>, %arg17: memref<1x128xf32, #tpu.memory_space<vmem>>, %arg18: memref<8x128xf32, #tpu.memory_space<vmem>>) attributes {dimension_semantics = [#tpu.dimension_semantics<parallel>], iteration_bounds = array<i64: 2>, scalar_prefetch = 0 : i64, scratch_operands = 0 : i64, tpu.core_type = #tpu.core_type<tc>, window_params = [{transform_indices = @transform_0, window_bounds = array<i64: 8, 128>}, {pipeline_mode = #tpu.pipeline_mode<synchronous>, transform_indices = @transform_1, window_bounds = array<i64: 128, 1536>}, {pipeline_mode = #tpu.pipeline_mode<synchronous>, transform_indices = @transform_2, window_bounds = array<i64: 1, 1536>}, {pipeline_mode = #tpu.pipeline_mode<synchronous>, transform_indices = @transform_3, window_bounds = array<i64: 128, 640>}, {pipeline_mode = #tpu.pipeline_mode<synchronous>, transform_indices = @transform_4, window_bounds = array<i64: 128, 128>}, {pipeline_mode = #tpu.pipeline_mode<synchronous>, transform_indices = @transform_5, window_bounds = array<i64: 1, 128>}, {pipeline_mode = #tpu.pipeline_mode<synchronous>, transform_indices = @transform_6, window_bounds = array<i64: 128, 128>}, {pipeline_mode = #tpu.pipeline_mode<synchronous>, transform_indices = @transform_7, window_bounds = array<i64: 1, 128>}, {pipeline_mode = #tpu.pipeline_mode<synchronous>, transform_indices = @transform_8, window_bounds = array<i64: 1, 128>}, {pipeline_mode = #tpu.pipeline_mode<synchronous>, transform_indices = @transform_9, window_bounds = array<i64: 128, 128>}, {pipeline_mode = #tpu.pipeline_mode<synchronous>, transform_indices = @transform_10, window_bounds = array<i64: 1, 128>}, {pipeline_mode = #tpu.pipeline_mode<synchronous>, transform_indices = @transform_11, window_bounds = array<i64: 128, 128>}, {pipeline_mode = #tpu.pipeline_mode<synchronous>, transform_indices = @transform_12, window_bounds = array<i64: 1, 128>}, {pipeline_mode = #tpu.pipeline_mode<synchronous>, transform_indices = @transform_13, window_bounds = array<i64: 1, 128>}, {pipeline_mode = #tpu.pipeline_mode<synchronous>, transform_indices = @transform_14, window_bounds = array<i64: 1, 128>}, {pipeline_mode = #tpu.pipeline_mode<synchronous>, transform_indices = @transform_15, window_bounds = array<i64: 128, 128>}, {pipeline_mode = #tpu.pipeline_mode<synchronous>, transform_indices = @transform_16, window_bounds = array<i64: 1, 128>}, {transform_indices = @transform_17, window_bounds = array<i64: 8, 128>}]} {
    %c0 = arith.constant 0 : index
    %c0_0 = arith.constant 0 : index
    %0 = vector.load %arg1[%c0, %c0_0] : memref<8x128xbf16, #tpu.memory_space<vmem>>, vector<8x128xbf16>
    %1 = arith.extf %0 : vector<8x128xbf16> to vector<8x128xf32>
    %c0_1 = arith.constant 0 : index
    %c0_2 = arith.constant 0 : index
    %2 = vector.load %arg2[%c0_1, %c0_2] : memref<128x1536xbf16, #tpu.memory_space<vmem>>, vector<128x1536xbf16>
    %cst = arith.constant dense<0.000000e+00> : vector<8x1536xf32>
    %3 = tpu.matmul %0, %2, %cst {dimension_numbers = #tpu.dot_dimension_numbers<[1], [0], [0], [1], [0, 0, 1, 1], [], []>} : vector<8x128xbf16>, vector<128x1536xbf16>, vector<8x1536xf32> -> vector<8x1536xf32>
    %c0_3 = arith.constant 0 : index
    %c0_4 = arith.constant 0 : index
    %4 = vector.load %arg3[%c0_3, %c0_4] : memref<1x1536xf32, #tpu.memory_space<vmem>>, vector<1x1536xf32>
    %5 = vector.broadcast %4 : vector<1x1536xf32> to vector<8x1536xf32>
    %6 = arith.addf %3, %5 : vector<8x1536xf32>
    %7 = vector.extract_strided_slice %6 {offsets = [0, 0], sizes = [8, 512], strides = [1, 1]} : vector<8x1536xf32> to vector<8x512xf32>
    %8 = vector.extract_strided_slice %6 {offsets = [0, 512], sizes = [8, 512], strides = [1, 1]} : vector<8x1536xf32> to vector<8x512xf32>
    %9 = vector.extract_strided_slice %6 {offsets = [0, 1024], sizes = [8, 512], strides = [1, 1]} : vector<8x1536xf32> to vector<8x512xf32>
    %10 = arith.mulf %7, %8 : vector<8x512xf32>
    %11 = vector.extract_strided_slice %10 {offsets = [0, 0], sizes = [8, 128], strides = [1, 1]} : vector<8x512xf32> to vector<8x128xf32>
    %12 = vector.extract_strided_slice %10 {offsets = [0, 128], sizes = [8, 128], strides = [1, 1]} : vector<8x512xf32> to vector<8x128xf32>
    %13 = vector.extract_strided_slice %10 {offsets = [0, 256], sizes = [8, 128], strides = [1, 1]} : vector<8x512xf32> to vector<8x128xf32>
    %14 = vector.extract_strided_slice %10 {offsets = [0, 384], sizes = [8, 128], strides = [1, 1]} : vector<8x512xf32> to vector<8x128xf32>
    %15 = arith.addf %11, %12 : vector<8x128xf32>
    %16 = arith.addf %13, %14 : vector<8x128xf32>
    %17 = arith.addf %15, %16 : vector<8x128xf32>
    %cst_5 = arith.constant dense<0xFF800000> : vector<8xf32>
    %18 = vector.multi_reduction <maximumf>, %17, %cst_5 [1] : vector<8x128xf32> to vector<8xf32>
    %19 = vector.shape_cast %18 : vector<8xf32> to vector<8x1xf32>
    %20 = vector.broadcast %19 : vector<8x1xf32> to vector<8x128xf32>
    %21 = arith.subf %17, %20 : vector<8x128xf32>
    %22 = math.exp %21 : vector<8x128xf32>
    %c0_6 = arith.constant 0 : index
    %c0_7 = arith.constant 0 : index
    %23 = vector.load %arg4[%c0_6, %c0_7] : memref<128x640xbf16, #tpu.memory_space<vmem>>, vector<128x640xbf16>
    %24 = arith.truncf %22 : vector<8x128xf32> to vector<8x128xbf16>
    %cst_8 = arith.constant dense<0.000000e+00> : vector<8x640xf32>
    %25 = tpu.matmul %24, %23, %cst_8 {dimension_numbers = #tpu.dot_dimension_numbers<[1], [0], [0], [1], [0, 0, 1, 1], [], []>} : vector<8x128xbf16>, vector<128x640xbf16>, vector<8x640xf32> -> vector<8x640xf32>
    %26 = vector.extract_strided_slice %25 {offsets = [0, 0], sizes = [8, 512], strides = [1, 1]} : vector<8x640xf32> to vector<8x512xf32>
    %27 = arith.mulf %26, %9 : vector<8x512xf32>
    %28 = vector.extract_strided_slice %27 {offsets = [0, 0], sizes = [8, 128], strides = [1, 1]} : vector<8x512xf32> to vector<8x128xf32>
    %29 = vector.extract_strided_slice %27 {offsets = [0, 128], sizes = [8, 128], strides = [1, 1]} : vector<8x512xf32> to vector<8x128xf32>
    %30 = vector.extract_strided_slice %27 {offsets = [0, 256], sizes = [8, 128], strides = [1, 1]} : vector<8x512xf32> to vector<8x128xf32>
    %31 = vector.extract_strided_slice %27 {offsets = [0, 384], sizes = [8, 128], strides = [1, 1]} : vector<8x512xf32> to vector<8x128xf32>
    %32 = arith.addf %28, %29 : vector<8x128xf32>
    %33 = arith.addf %30, %31 : vector<8x128xf32>
    %34 = arith.addf %32, %33 : vector<8x128xf32>
    %35 = vector.extract_strided_slice %25 {offsets = [0, 512], sizes = [8, 128], strides = [1, 1]} : vector<8x640xf32> to vector<8x128xf32>
    %cst_9 = arith.constant 1.000000e-30 : f32
    %36 = vector.broadcast %cst_9 : f32 to vector<8x128xf32>
    %37 = arith.maximumf %35, %36 : vector<8x128xf32>
    %38 = tpu.reciprocal %37 {approx = true} : vector<8x128xf32> -> vector<8x128xf32>
    %39 = arith.mulf %34, %38 : vector<8x128xf32>
    %c0_10 = arith.constant 0 : index
    %c0_11 = arith.constant 0 : index
    %40 = vector.load %arg5[%c0_10, %c0_11] : memref<128x128xbf16, #tpu.memory_space<vmem>>, vector<128x128xbf16>
    %41 = arith.truncf %39 : vector<8x128xf32> to vector<8x128xbf16>
    %cst_12 = arith.constant dense<0.000000e+00> : vector<8x128xf32>
    %42 = tpu.matmul %41, %40, %cst_12 {dimension_numbers = #tpu.dot_dimension_numbers<[1], [0], [0], [1], [0, 0, 1, 1], [], []>} : vector<8x128xbf16>, vector<128x128xbf16>, vector<8x128xf32> -> vector<8x128xf32>
    %c0_13 = arith.constant 0 : index
    %c0_14 = arith.constant 0 : index
    %43 = vector.load %arg6[%c0_13, %c0_14] : memref<1x128xf32, #tpu.memory_space<vmem>>, vector<1x128xf32>
    %44 = vector.broadcast %43 : vector<1x128xf32> to vector<8x128xf32>
    %45 = arith.addf %42, %44 : vector<8x128xf32>
    %c0_15 = arith.constant 0 : index
    %c0_16 = arith.constant 0 : index
    %46 = vector.load %arg7[%c0_15, %c0_16] : memref<128x128xbf16, #tpu.memory_space<vmem>>, vector<128x128xbf16>
    %47 = arith.addf %1, %45 : vector<8x128xf32>
    %c0_17 = arith.constant 0 : index
    %c0_18 = arith.constant 0 : index
    %48 = vector.load %arg8[%c0_17, %c0_18] : memref<1x128xf32, #tpu.memory_space<vmem>>, vector<1x128xf32>
    %c0_19 = arith.constant 0 : index
    %c0_20 = arith.constant 0 : index
    %49 = vector.load %arg9[%c0_19, %c0_20] : memref<1x128xf32, #tpu.memory_space<vmem>>, vector<1x128xf32>
    %50 = arith.truncf %47 : vector<8x128xf32> to vector<8x128xbf16>
    %cst_21 = arith.constant dense<0.000000e+00> : vector<8x128xf32>
    %51 = tpu.matmul %50, %46, %cst_21 {dimension_numbers = #tpu.dot_dimension_numbers<[1], [0], [0], [1], [0, 0, 1, 1], [], []>} : vector<8x128xbf16>, vector<128x128xbf16>, vector<8x128xf32> -> vector<8x128xf32>
    %52 = arith.mulf %47, %47 : vector<8x128xf32>
    %53 = arith.truncf %52 : vector<8x128xf32> to vector<8x128xbf16>
    %cst_22 = arith.constant dense<0.000000e+00> : vector<8x128xf32>
    %54 = tpu.matmul %53, %46, %cst_22 {dimension_numbers = #tpu.dot_dimension_numbers<[1], [0], [0], [1], [0, 0, 1, 1], [], []>} : vector<8x128xbf16>, vector<128x128xbf16>, vector<8x128xf32> -> vector<8x128xf32>
    %55 = arith.mulf %51, %51 : vector<8x128xf32>
    %56 = arith.subf %54, %55 : vector<8x128xf32>
    %cst_23 = arith.constant 0.000000e+00 : f32
    %57 = vector.broadcast %cst_23 : f32 to vector<8x128xf32>
    %58 = arith.maximumf %56, %57 : vector<8x128xf32>
    %59 = arith.subf %47, %51 : vector<8x128xf32>
    %cst_24 = arith.constant 9.99999974E-6 : f32
    %60 = vector.broadcast %cst_24 : f32 to vector<8x128xf32>
    %61 = arith.addf %58, %60 : vector<8x128xf32>
    %62 = math.rsqrt %61 : vector<8x128xf32>
    %63 = arith.mulf %59, %62 : vector<8x128xf32>
    %64 = vector.broadcast %48 : vector<1x128xf32> to vector<8x128xf32>
    %65 = arith.mulf %63, %64 : vector<8x128xf32>
    %66 = vector.broadcast %49 : vector<1x128xf32> to vector<8x128xf32>
    %67 = arith.addf %65, %66 : vector<8x128xf32>
    %c0_25 = arith.constant 0 : index
    %c0_26 = arith.constant 0 : index
    %68 = vector.load %arg10[%c0_25, %c0_26] : memref<128x128xbf16, #tpu.memory_space<vmem>>, vector<128x128xbf16>
    %69 = arith.truncf %67 : vector<8x128xf32> to vector<8x128xbf16>
    %cst_27 = arith.constant dense<0.000000e+00> : vector<8x128xf32>
    %70 = tpu.matmul %69, %68, %cst_27 {dimension_numbers = #tpu.dot_dimension_numbers<[1], [0], [0], [1], [0, 0, 1, 1], [], []>} : vector<8x128xbf16>, vector<128x128xbf16>, vector<8x128xf32> -> vector<8x128xf32>
    %c0_28 = arith.constant 0 : index
    %c0_29 = arith.constant 0 : index
    %71 = vector.load %arg11[%c0_28, %c0_29] : memref<1x128xf32, #tpu.memory_space<vmem>>, vector<1x128xf32>
    %72 = vector.broadcast %71 : vector<1x128xf32> to vector<8x128xf32>
    %73 = arith.addf %70, %72 : vector<8x128xf32>
    %cst_30 = arith.constant 0.000000e+00 : f32
    %74 = vector.broadcast %cst_30 : f32 to vector<8x128xf32>
    %75 = arith.maximumf %73, %74 : vector<8x128xf32>
    %c0_31 = arith.constant 0 : index
    %c0_32 = arith.constant 0 : index
    %76 = vector.load %arg12[%c0_31, %c0_32] : memref<128x128xbf16, #tpu.memory_space<vmem>>, vector<128x128xbf16>
    %77 = arith.truncf %75 : vector<8x128xf32> to vector<8x128xbf16>
    %cst_33 = arith.constant dense<0.000000e+00> : vector<8x128xf32>
    %78 = tpu.matmul %77, %76, %cst_33 {dimension_numbers = #tpu.dot_dimension_numbers<[1], [0], [0], [1], [0, 0, 1, 1], [], []>} : vector<8x128xbf16>, vector<128x128xbf16>, vector<8x128xf32> -> vector<8x128xf32>
    %c0_34 = arith.constant 0 : index
    %c0_35 = arith.constant 0 : index
    %79 = vector.load %arg13[%c0_34, %c0_35] : memref<1x128xf32, #tpu.memory_space<vmem>>, vector<1x128xf32>
    %80 = vector.broadcast %79 : vector<1x128xf32> to vector<8x128xf32>
    %81 = arith.addf %78, %80 : vector<8x128xf32>
    %82 = arith.addf %67, %81 : vector<8x128xf32>
    %c0_36 = arith.constant 0 : index
    %c0_37 = arith.constant 0 : index
    %83 = vector.load %arg14[%c0_36, %c0_37] : memref<1x128xf32, #tpu.memory_space<vmem>>, vector<1x128xf32>
    %c0_38 = arith.constant 0 : index
    %c0_39 = arith.constant 0 : index
    %84 = vector.load %arg15[%c0_38, %c0_39] : memref<1x128xf32, #tpu.memory_space<vmem>>, vector<1x128xf32>
    %85 = arith.truncf %82 : vector<8x128xf32> to vector<8x128xbf16>
    %cst_40 = arith.constant dense<0.000000e+00> : vector<8x128xf32>
    %86 = tpu.matmul %85, %46, %cst_40 {dimension_numbers = #tpu.dot_dimension_numbers<[1], [0], [0], [1], [0, 0, 1, 1], [], []>} : vector<8x128xbf16>, vector<128x128xbf16>, vector<8x128xf32> -> vector<8x128xf32>
    %87 = arith.mulf %82, %82 : vector<8x128xf32>
    %88 = arith.truncf %87 : vector<8x128xf32> to vector<8x128xbf16>
    %cst_41 = arith.constant dense<0.000000e+00> : vector<8x128xf32>
    %89 = tpu.matmul %88, %46, %cst_41 {dimension_numbers = #tpu.dot_dimension_numbers<[1], [0], [0], [1], [0, 0, 1, 1], [], []>} : vector<8x128xbf16>, vector<128x128xbf16>, vector<8x128xf32> -> vector<8x128xf32>
    %90 = arith.mulf %86, %86 : vector<8x128xf32>
    %91 = arith.subf %89, %90 : vector<8x128xf32>
    %cst_42 = arith.constant 0.000000e+00 : f32
    %92 = vector.broadcast %cst_42 : f32 to vector<8x128xf32>
    %93 = arith.maximumf %91, %92 : vector<8x128xf32>
    %94 = arith.subf %82, %86 : vector<8x128xf32>
    %cst_43 = arith.constant 9.99999974E-6 : f32
    %95 = vector.broadcast %cst_43 : f32 to vector<8x128xf32>
    %96 = arith.addf %93, %95 : vector<8x128xf32>
    %97 = math.rsqrt %96 : vector<8x128xf32>
    %98 = arith.mulf %94, %97 : vector<8x128xf32>
    %99 = vector.broadcast %83 : vector<1x128xf32> to vector<8x128xf32>
    %100 = arith.mulf %98, %99 : vector<8x128xf32>
    %101 = vector.broadcast %84 : vector<1x128xf32> to vector<8x128xf32>
    %102 = arith.addf %100, %101 : vector<8x128xf32>
    %c0_44 = arith.constant 0 : index
    %c0_45 = arith.constant 0 : index
    %103 = vector.load %arg16[%c0_44, %c0_45] : memref<128x128xbf16, #tpu.memory_space<vmem>>, vector<128x128xbf16>
    %104 = arith.truncf %102 : vector<8x128xf32> to vector<8x128xbf16>
    %cst_46 = arith.constant dense<0.000000e+00> : vector<8x128xf32>
    %105 = tpu.matmul %104, %103, %cst_46 {dimension_numbers = #tpu.dot_dimension_numbers<[1], [0], [0], [1], [0, 0, 1, 1], [], []>} : vector<8x128xbf16>, vector<128x128xbf16>, vector<8x128xf32> -> vector<8x128xf32>
    %c0_47 = arith.constant 0 : index
    %c0_48 = arith.constant 0 : index
    %106 = vector.load %arg17[%c0_47, %c0_48] : memref<1x128xf32, #tpu.memory_space<vmem>>, vector<1x128xf32>
    %107 = vector.broadcast %106 : vector<1x128xf32> to vector<8x128xf32>
    %108 = arith.addf %105, %107 : vector<8x128xf32>
    %c0_49 = arith.constant 0 : index
    %c0_50 = arith.constant 0 : index
    %109 = vector.load %arg18[%c0_49, %c0_50] : memref<8x128xf32, #tpu.memory_space<vmem>>, vector<8x128xf32>
    tpu.vector_store %arg18[%c0_49, %c0_50], %108 {strides = array<i32>} : memref<8x128xf32, #tpu.memory_space<vmem>>, vector<8x128xf32>,
    return
  }
  func.func @transform_0(%arg0: i32) -> (i32, i32) {
    %c0_i32 = arith.constant 0 : i32
    %c0_i32_0 = arith.constant 0 : i32
    return %arg0, %c0_i32 : i32, i32
  }
  func.func @transform_1(%arg0: i32) -> (i32, i32) {
    %c0_i32 = arith.constant 0 : i32
    %c0_i32_0 = arith.constant 0 : i32
    %c0_i32_1 = arith.constant 0 : i32
    return %c0_i32, %c0_i32_0 : i32, i32
  }
  func.func @transform_2(%arg0: i32) -> (i32, i32) {
    %c0_i32 = arith.constant 0 : i32
    %c0_i32_0 = arith.constant 0 : i32
    %c0_i32_1 = arith.constant 0 : i32
    return %c0_i32, %c0_i32_0 : i32, i32
  }
  func.func @transform_3(%arg0: i32) -> (i32, i32) {
    %c0_i32 = arith.constant 0 : i32
    %c0_i32_0 = arith.constant 0 : i32
    %c0_i32_1 = arith.constant 0 : i32
    return %c0_i32, %c0_i32_0 : i32, i32
  }
  func.func @transform_4(%arg0: i32) -> (i32, i32) {
    %c0_i32 = arith.constant 0 : i32
    %c0_i32_0 = arith.constant 0 : i32
    %c0_i32_1 = arith.constant 0 : i32
    return %c0_i32, %c0_i32_0 : i32, i32
  }
  func.func @transform_5(%arg0: i32) -> (i32, i32) {
    %c0_i32 = arith.constant 0 : i32
    %c0_i32_0 = arith.constant 0 : i32
    %c0_i32_1 = arith.constant 0 : i32
    return %c0_i32, %c0_i32_0 : i32, i32
  }
  func.func @transform_6(%arg0: i32) -> (i32, i32) {
    %c0_i32 = arith.constant 0 : i32
    %c0_i32_0 = arith.constant 0 : i32
    %c0_i32_1 = arith.constant 0 : i32
    return %c0_i32, %c0_i32_0 : i32, i32
  }
  func.func @transform_7(%arg0: i32) -> (i32, i32) {
    %c0_i32 = arith.constant 0 : i32
    %c0_i32_0 = arith.constant 0 : i32
    %c0_i32_1 = arith.constant 0 : i32
    return %c0_i32, %c0_i32_0 : i32, i32
  }
  func.func @transform_8(%arg0: i32) -> (i32, i32) {
    %c0_i32 = arith.constant 0 : i32
    %c0_i32_0 = arith.constant 0 : i32
    %c0_i32_1 = arith.constant 0 : i32
    return %c0_i32, %c0_i32_0 : i32, i32
  }
  func.func @transform_9(%arg0: i32) -> (i32, i32) {
    %c0_i32 = arith.constant 0 : i32
    %c0_i32_0 = arith.constant 0 : i32
    %c0_i32_1 = arith.constant 0 : i32
    return %c0_i32, %c0_i32_0 : i32, i32
  }
  func.func @transform_10(%arg0: i32) -> (i32, i32) {
    %c0_i32 = arith.constant 0 : i32
    %c0_i32_0 = arith.constant 0 : i32
    %c0_i32_1 = arith.constant 0 : i32
    return %c0_i32, %c0_i32_0 : i32, i32
  }
  func.func @transform_11(%arg0: i32) -> (i32, i32) {
    %c0_i32 = arith.constant 0 : i32
    %c0_i32_0 = arith.constant 0 : i32
    %c0_i32_1 = arith.constant 0 : i32
    return %c0_i32, %c0_i32_0 : i32, i32
  }
  func.func @transform_12(%arg0: i32) -> (i32, i32) {
    %c0_i32 = arith.constant 0 : i32
    %c0_i32_0 = arith.constant 0 : i32
    %c0_i32_1 = arith.constant 0 : i32
    return %c0_i32, %c0_i32_0 : i32, i32
  }
  func.func @transform_13(%arg0: i32) -> (i32, i32) {
    %c0_i32 = arith.constant 0 : i32
    %c0_i32_0 = arith.constant 0 : i32
    %c0_i32_1 = arith.constant 0 : i32
    return %c0_i32, %c0_i32_0 : i32, i32
  }
  func.func @transform_14(%arg0: i32) -> (i32, i32) {
    %c0_i32 = arith.constant 0 : i32
    %c0_i32_0 = arith.constant 0 : i32
    %c0_i32_1 = arith.constant 0 : i32
    return %c0_i32, %c0_i32_0 : i32, i32
  }
  func.func @transform_15(%arg0: i32) -> (i32, i32) {
    %c0_i32 = arith.constant 0 : i32
    %c0_i32_0 = arith.constant 0 : i32
    %c0_i32_1 = arith.constant 0 : i32
    return %c0_i32, %c0_i32_0 : i32, i32
  }
  func.func @transform_16(%arg0: i32) -> (i32, i32) {
    %c0_i32 = arith.constant 0 : i32
    %c0_i32_0 = arith.constant 0 : i32
    %c0_i32_1 = arith.constant 0 : i32
    return %c0_i32, %c0_i32_0 : i32, i32
  }
  func.func @transform_17(%arg0: i32) -> (i32, i32) {
    %c0_i32 = arith.constant 0 : i32
    %c0_i32_0 = arith.constant 0 : i32
    return %arg0, %c0_i32 : i32, i32
  }
}

</mosaic_0001>

<llo_original>
// kernel: tile.53
$region0: #{tile.53}
  #allocation0 [shape = 's32[1]{0}', space=sflag, size = 0x4, scoped, tag = 'scoped memory for tile.53']
  %s0 = inlined_call_operand.vmem [shape: f32[32], index: 0, kind: input, shape index: {}]
  %s1 = inlined_call_operand.vmem [shape: f32[4,32], index: 1, kind: output, shape index: {}]
  // Predicated region
  $region2: #{tile.53} parent=0 // pred_check
    _
  $region3: #{tile.53} parent=0 // pred_check_branch
    %3 = sbr.rel (0) target = $region5
  $region4: #{tile.53} parent=0 // pred_region
    _
  $region5: #{tile.53} parent=0 // pred_fallthru
    _
  %v4 = vld [vmem:[%s0] ss:$0 sm:$0xff]
  %5 = vst [vmem:[%s1] sm:$0xf] %v4

// kernel: tile.69
$region0: #{tile.69}
  %s0 = inlined_call_operand.vmem [shape: f32[4,32], index: 0, kind: input, shape index: {}]
  %s1 = inlined_call_operand.vmem [shape: f32[1,128], index: 1, kind: output, shape index: {}]
  $region1: #{tile.69} parent=0
    #allocation0 [shape = 'u8[4096]{0}', space=vmem, size = 0x1000, scoped, tag = 'scoped mem for output reshape']
    #allocation1 [shape = 'u8[4096]{0}', space=vmem, size = 0x1000, scoped, tag = 'scoped mem for input reshape']
    %s3 = sshllo.u32 0, 4
    %v4 = vld [vmem:[%s0] sm:%s3]
    %5 = vst [vmem:[#allocation1] sm:%s3] %v4
    %v6 = vld [vmem:[#allocation1] sm:$0x1]
    %vm7 = vcmask 261120
    %8 = vst.msk [vmem:[#allocation0] sm:$0x1] %vm7, %v6
    %s9 = scalar_lea.vmem [#allocation1], 3
    %v10 = vld [vmem:[%s9] sm:$0x1]
    %11 = vrot.lane.b32.xlu0 %v10, 96
    %v12 = vpop.permute.xlu0 %11
    %vm13 = vcmask 1048320
    %14 = vst.msk [vmem:[#allocation0] sm:$0x1] %vm13, %v12
    %s15 = scalar_lea.vmem [#allocation1], 2
    %v16 = vld [vmem:[%s15] sm:$0x1]
    %17 = vrot.lane.b32.xlu0 %v16, 64
    %v18 = vpop.permute.xlu0 %17
    %vm19 = vcmask 785920
    %20 = vst.msk [vmem:[#allocation0] sm:$0x1] %vm19, %v18
    %s21 = scalar_lea.vmem [#allocation1], 1
    %v22 = vld [vmem:[%s21] sm:$0x1]
    %23 = vrot.lane.b32.xlu0 %v22, 32
    %v24 = vpop.permute.xlu0 %23
    %vm25 = vcmask 523520
    %26 = vst.msk [vmem:[#allocation0] sm:$0x1] %vm25, %v24
    %s28 = sshllo.u32 0, 1
    %v30 = vld [vmem:[#allocation0] sm:%s28]
    %s31 = sshllo.u32 0, 1
    %32 = vst [vmem:[%s1] sm:%s31] %v30

// kernel: row_encoder_forward.1
$region0: #{row_encoder_forward.1}
  #allocation0 [shape = 'u32[]', space=smem, size = 0x4, offset = 0x4, fixed_abs, tag = 'smem constant byte address 0x4 - core index']
  #allocation1 [shape = 'u32[144,128]{1,0:T(1,128)}', space=vmem, size = 0x12000, scoped, tag = 'internal scratch']
  %s0 = inlined_call_operand.vmem [shape: bf16[16,128], index: 0, kind: input, shape index: {}]
  %s1 = inlined_call_operand.vmem [shape: bf16[128,1536], index: 1, kind: input, shape index: {}]
  %s2 = inlined_call_operand.vmem [shape: f32[1,1536], index: 2, kind: input, shape index: {}]
  %s3 = inlined_call_operand.vmem [shape: bf16[128,640], index: 3, kind: input, shape index: {}]
  %s4 = inlined_call_operand.vmem [shape: bf16[128,128], index: 4, kind: input, shape index: {}]
  %s5 = inlined_call_operand.vmem [shape: f32[1,128], index: 5, kind: input, shape index: {}]
  %s6 = inlined_call_operand.vmem [shape: bf16[128,128], index: 6, kind: input, shape index: {}]
  %s7 = inlined_call_operand.vmem [shape: f32[1,128], index: 7, kind: input, shape index: {}]
  %s8 = inlined_call_operand.vmem [shape: f32[1,128], index: 8, kind: input, shape index: {}]
  %s9 = inlined_call_operand.vmem [shape: bf16[128,128], index: 9, kind: input, shape index: {}]
  %s10 = inlined_call_operand.vmem [shape: f32[1,128], index: 10, kind: input, shape index: {}]
  %s11 = inlined_call_operand.vmem [shape: bf16[128,128], index: 11, kind: input, shape index: {}]
  %s12 = inlined_call_operand.vmem [shape: f32[1,128], index: 12, kind: input, shape index: {}]
  %s13 = inlined_call_operand.vmem [shape: f32[1,128], index: 13, kind: input, shape index: {}]
  %s14 = inlined_call_operand.vmem [shape: f32[1,128], index: 14, kind: input, shape index: {}]
  %s15 = inlined_call_operand.vmem [shape: bf16[128,128], index: 15, kind: input, shape index: {}]
  %s16 = inlined_call_operand.vmem [shape: f32[1,128], index: 16, kind: input, shape index: {}]
  %s17 = inlined_call_operand.vmem [shape: f32[16,128], index: 17, kind: output, shape index: {}]
  %s18 = sld [smem:[#allocation0]]
  $region101: #{row_encoder_forward.1} parent=0
    _
  %s20 = ssub.s32 1, %s18
  %s21 = scalar_select 0, %s20, %s18
  loop: start=0, step=1, limit=4
  $region2: #{row_encoder_forward.1} parent=0 // loop_pre_header
    _
  $region3: #{row_encoder_forward.1} parent=0 // loop_header
    %s23 = sphi 0, %s27
    %p24 = scmp.ge.s32.totalorder %s23, 4
    %s33 = sphi 0, %s35
    %s36 = sphi 0, %s33
    %s37 = sphi 0, %s36
    %s53 = sphi 0, %s37
    %s57 = sphi 0, %s57
    %s59 = sphi 0, %s57
    %s60 = sphi 0, %s59
    %s74 = sphi 0, %s60
    %s78 = sphi 0, %s78
    %s80 = sphi 0, %s78
    %s81 = sphi 0, %s80
    %s95 = sphi 0, %s81
    %s99 = sphi 0, %s99
    %s101 = sphi 0, %s99
    %s102 = sphi 0, %s101
    %s116 = sphi 0, %s102
    %s120 = sphi 0, %s120
    %s122 = sphi 0, %s120
    %s123 = sphi 0, %s122
    %s137 = sphi 0, %s123
    %s141 = sphi 0, %s141
    %s143 = sphi 0, %s141
    %s144 = sphi 0, %s143
    %s158 = sphi 0, %s144
    %s162 = sphi 0, %s162
    %s164 = sphi 0, %s162
    %s165 = sphi 0, %s164
    %s179 = sphi 0, %s165
    %s183 = sphi 0, %s183
    %s185 = sphi 0, %s183
    %s186 = sphi 0, %s185
    %s200 = sphi 0, %s186
    %s204 = sphi 0, %s204
    %s206 = sphi 0, %s204
    %s207 = sphi 0, %s206
    %s221 = sphi 0, %s207
    %s225 = sphi 0, %s225
    %s227 = sphi 0, %s225
    %s228 = sphi 0, %s227
    %s242 = sphi 0, %s228
    %s246 = sphi 0, %s246
    %s248 = sphi 0, %s246
    %s249 = sphi 0, %s248
    %s263 = sphi 0, %s249
    %s267 = sphi 0, %s267
    %s269 = sphi 0, %s267
    %s270 = sphi 0, %s269
    %s284 = sphi 0, %s270
    %s288 = sphi 0, %s288
    %s290 = sphi 0, %s288
    %s291 = sphi 0, %s290
    %s305 = sphi 0, %s291
    %s309 = sphi 0, %s309
    %s311 = sphi 0, %s309
    %s312 = sphi 0, %s311
    %s326 = sphi 0, %s312
    %s330 = sphi 0, %s330
    %s332 = sphi 0, %s330
    %s333 = sphi 0, %s332
    %s347 = sphi 0, %s333
    %s351 = sphi 0, %s351
    %s353 = sphi 0, %s351
    %s354 = sphi 0, %s353
    %s368 = sphi 0, %s354
    %s372 = sphi 0, %s372
    %s374 = sphi 0, %s372
    %s375 = sphi 0, %s374
    %s389 = sphi 0, %s375
    %s395 = sphi 0, %s397
    %s398 = sphi 0, %s395
    %s399 = sphi 0, %s398
    %s415 = sphi 0, %s399
  $region4: #{row_encoder_forward.1} parent=0 // loop_header_branch
    %26 = sbr.rel (%p24) target = $region8
  $region5: #{row_encoder_forward.1} parent=0 // loop_body
    %s28 = ssub.s32 %s23, 1
    %s29 = ssub.s32 %s23, 2
    %s30 = sadd.s32 %s23, 1
    %s31 = ssub.s32 %s23, %s30
    %p32 = scmp.eq.s32.totalorder %s31, 0
    %s34 = sadd.s32 %s33, 1
    %s35 = scalar_select %p32, %s33, %s34
    %p38 = pneg %p32
    %p39 = scmp.eq.s32.totalorder %s23, 1
    %p40 = por %p38, %p39
    %p41 = scmp.ne.s32.totalorder %s33, %s36
    %p42 = scmp.eq.s32.totalorder %s23, 0
    %p43 = por %p41, %p42
    %p44 = scmp.ne.s32.totalorder %s33, %s36
    %p45 = scmp.eq.s32.totalorder %s28, 1
    %p46 = por %p44, %p45
    %p47 = scmp.ne.s32.totalorder %s36, %s37
    %p48 = scmp.eq.s32.totalorder %s28, 0
    %p49 = por %p47, %p48
    %p50 = scmp.ne.s32.totalorder %s36, %s37
    %p51 = scmp.eq.s32.totalorder %s29, 1
    %p52 = por %p50, %p51
    %p54 = scmp.ne.s32.totalorder %s37, %s53
    %p55 = scmp.eq.s32.totalorder %s29, 0
    %p56 = por %p54, %p55
    %s58 = sadd.s32 %s57, 1
    %p61 = scmp.eq.s32.totalorder %s23, 1
    %p62 = scmp.ne.s32.totalorder %s57, %s59
    %p63 = scmp.eq.s32.totalorder %s23, 0
    %p64 = por %p62, %p63
    %p65 = scmp.ne.s32.totalorder %s57, %s59
    %p66 = scmp.eq.s32.totalorder %s28, 1
    %p67 = por %p65, %p66
    %p68 = scmp.ne.s32.totalorder %s59, %s60
    %p69 = scmp.eq.s32.totalorder %s28, 0
    %p70 = por %p68, %p69
    %p71 = scmp.ne.s32.totalorder %s59, %s60
    %p72 = scmp.eq.s32.totalorder %s29, 1
    %p73 = por %p71, %p72
    %p75 = scmp.ne.s32.totalorder %s60, %s74
    %p76 = scmp.eq.s32.totalorder %s29, 0
    %p77 = por %p75, %p76
    %s79 = sadd.s32 %s78, 1
    %p82 = scmp.eq.s32.totalorder %s23, 1
    %p83 = scmp.ne.s32.totalorder %s78, %s80
    %p84 = scmp.eq.s32.totalorder %s23, 0
    %p85 = por %p83, %p84
    %p86 = scmp.ne.s32.totalorder %s78, %s80
    %p87 = scmp.eq.s32.totalorder %s28, 1
    %p88 = por %p86, %p87
    %p89 = scmp.ne.s32.totalorder %s80, %s81
    %p90 = scmp.eq.s32.totalorder %s28, 0
    %p91 = por %p89, %p90
    %p92 = scmp.ne.s32.totalorder %s80, %s81
    %p93 = scmp.eq.s32.totalorder %s29, 1
    %p94 = por %p92, %p93
    %p96 = scmp.ne.s32.totalorder %s81, %s95
    %p97 = scmp.eq.s32.totalorder %s29, 0
    %p98 = por %p96, %p97
    %s100 = sadd.s32 %s99, 1
    %p103 = scmp.eq.s32.totalorder %s23, 1
    %p104 = scmp.ne.s32.totalorder %s99, %s101
    %p105 = scmp.eq.s32.totalorder %s23, 0
    %p106 = por %p104, %p105
    %p107 = scmp.ne.s32.totalorder %s99, %s101
    %p108 = scmp.eq.s32.totalorder %s28, 1
    %p109 = por %p107, %p108
    %p110 = scmp.ne.s32.totalorder %s101, %s102
    %p111 = scmp.eq.s32.totalorder %s28, 0
    %p112 = por %p110, %p111
    %p113 = scmp.ne.s32.totalorder %s101, %s102
    %p114 = scmp.eq.s32.totalorder %s29, 1
    %p115 = por %p113, %p114
    %p117 = scmp.ne.s32.totalorder %s102, %s116
    %p118 = scmp.eq.s32.totalorder %s29, 0
    %p119 = por %p117, %p118
    %s121 = sadd.s32 %s120, 1
    %p124 = scmp.eq.s32.totalorder %s23, 1
    %p125 = scmp.ne.s32.totalorder %s120, %s122
    %p126 = scmp.eq.s32.totalorder %s23, 0
    %p127 = por %p125, %p126
    %p128 = scmp.ne.s32.totalorder %s120, %s122
    %p129 = scmp.eq.s32.totalorder %s28, 1
    %p130 = por %p128, %p129
    %p131 = scmp.ne.s32.totalorder %s122, %s123
    %p132 = scmp.eq.s32.totalorder %s28, 0
    %p133 = por %p131, %p132
    %p134 = scmp.ne.s32.totalorder %s122, %s123
    %p135 = scmp.eq.s32.totalorder %s29, 1
    %p136 = por %p134, %p135
    %p138 = scmp.ne.s32.totalorder %s123, %s137
    %p139 = scmp.eq.s32.totalorder %s29, 0
    %p140 = por %p138, %p139
    %s142 = sadd.s32 %s141, 1
    %p145 = scmp.eq.s32.totalorder %s23, 1
    %p146 = scmp.ne.s32.totalorder %s141, %s143
    %p147 = scmp.eq.s32.totalorder %s23, 0
    %p148 = por %p146, %p147
    %p149 = scmp.ne.s32.totalorder %s141, %s143
    %p150 = scmp.eq.s32.totalorder %s28, 1
    %p151 = por %p149, %p150
    %p152 = scmp.ne.s32.totalorder %s143, %s144
    %p153 = scmp.eq.s32.totalorder %s28, 0
    %p154 = por %p152, %p153
    %p155 = scmp.ne.s32.totalorder %s143, %s144
    %p156 = scmp.eq.s32.totalorder %s29, 1
    %p157 = por %p155, %p156
    %p159 = scmp.ne.s32.totalorder %s144, %s158
    %p160 = scmp.eq.s32.totalorder %s29, 0
    %p161 = por %p159, %p160
    %s163 = sadd.s32 %s162, 1
    %p166 = scmp.eq.s32.totalorder %s23, 1
    %p167 = scmp.ne.s32.totalorder %s162, %s164
    %p168 = scmp.eq.s32.totalorder %s23, 0
    %p169 = por %p167, %p168
    %p170 = scmp.ne.s32.totalorder %s162, %s164
    %p171 = scmp.eq.s32.totalorder %s28, 1
    %p172 = por %p170, %p171
    %p173 = scmp.ne.s32.totalorder %s164, %s165
    %p174 = scmp.eq.s32.totalorder %s28, 0
    %p175 = por %p173, %p174
    %p176 = scmp.ne.s32.totalorder %s164, %s165
    %p177 = scmp.eq.s32.totalorder %s29, 1
    %p178 = por %p176, %p177
    %p180 = scmp.ne.s32.totalorder %s165, %s179
    %p181 = scmp.eq.s32.totalorder %s29, 0
    %p182 = por %p180, %p181
    %s184 = sadd.s32 %s183, 1
    %p187 = scmp.eq.s32.totalorder %s23, 1
    %p188 = scmp.ne.s32.totalorder %s183, %s185
    %p189 = scmp.eq.s32.totalorder %s23, 0
    %p190 = por %p188, %p189
    %p191 = scmp.ne.s32.totalorder %s183, %s185
    %p192 = scmp.eq.s32.totalorder %s28, 1
    %p193 = por %p191, %p192
    %p194 = scmp.ne.s32.totalorder %s185, %s186
    %p195 = scmp.eq.s32.totalorder %s28, 0
    %p196 = por %p194, %p195
    %p197 = scmp.ne.s32.totalorder %s185, %s186
    %p198 = scmp.eq.s32.totalorder %s29, 1
    %p199 = por %p197, %p198
    %p201 = scmp.ne.s32.totalorder %s186, %s200
    %p202 = scmp.eq.s32.totalorder %s29, 0
    %p203 = por %p201, %p202
    %s205 = sadd.s32 %s204, 1
    %p208 = scmp.eq.s32.totalorder %s23, 1
    %p209 = scmp.ne.s32.totalorder %s204, %s206
    %p210 = scmp.eq.s32.totalorder %s23, 0
    %p211 = por %p209, %p210
    %p212 = scmp.ne.s32.totalorder %s204, %s206
    %p213 = scmp.eq.s32.totalorder %s28, 1
    %p214 = por %p212, %p213
    %p215 = scmp.ne.s32.totalorder %s206, %s207
    %p216 = scmp.eq.s32.totalorder %s28, 0
    %p217 = por %p215, %p216
    %p218 = scmp.ne.s32.totalorder %s206, %s207
    %p219 = scmp.eq.s32.totalorder %s29, 1
    %p220 = por %p218, %p219
    %p222 = scmp.ne.s32.totalorder %s207, %s221
    %p223 = scmp.eq.s32.totalorder %s29, 0
    %p224 = por %p222, %p223
    %s226 = sadd.s32 %s225, 1
    %p229 = scmp.eq.s32.totalorder %s23, 1
    %p230 = scmp.ne.s32.totalorder %s225, %s227
    %p231 = scmp.eq.s32.totalorder %s23, 0
    %p232 = por %p230, %p231
    %p233 = scmp.ne.s32.totalorder %s225, %s227
    %p234 = scmp.eq.s32.totalorder %s28, 1
    %p235 = por %p233, %p234
    %p236 = scmp.ne.s32.totalorder %s227, %s228
    %p237 = scmp.eq.s32.totalorder %s28, 0
    %p238 = por %p236, %p237
    %p239 = scmp.ne.s32.totalorder %s227, %s228
    %p240 = scmp.eq.s32.totalorder %s29, 1
    %p241 = por %p239, %p240
    %p243 = scmp.ne.s32.totalorder %s228, %s242
    %p244 = scmp.eq.s32.totalorder %s29, 0
    %p245 = por %p243, %p244
    %s247 = sadd.s32 %s246, 1
    %p250 = scmp.eq.s32.totalorder %s23, 1
    %p251 = scmp.ne.s32.totalorder %s246, %s248
    %p252 = scmp.eq.s32.totalorder %s23, 0
    %p253 = por %p251, %p252
    %p254 = scmp.ne.s32.totalorder %s246, %s248
    %p255 = scmp.eq.s32.totalorder %s28, 1
    %p256 = por %p254, %p255
    %p257 = scmp.ne.s32.totalorder %s248, %s249
    %p258 = scmp.eq.s32.totalorder %s28, 0
    %p259 = por %p257, %p258
    %p260 = scmp.ne.s32.totalorder %s248, %s249
    %p261 = scmp.eq.s32.totalorder %s29, 1
    %p262 = por %p260, %p261
    %p264 = scmp.ne.s32.totalorder %s249, %s263
    %p265 = scmp.eq.s32.totalorder %s29, 0
    %p266 = por %p264, %p265
    %s268 = sadd.s32 %s267, 1
    %p271 = scmp.eq.s32.totalorder %s23, 1
    %p272 = scmp.ne.s32.totalorder %s267, %s269
    %p273 = scmp.eq.s32.totalorder %s23, 0
    %p274 = por %p272, %p273
    %p275 = scmp.ne.s32.totalorder %s267, %s269
    %p276 = scmp.eq.s32.totalorder %s28, 1
    %p277 = por %p275, %p276
    %p278 = scmp.ne.s32.totalorder %s269, %s270
    %p279 = scmp.eq.s32.totalorder %s28, 0
    %p280 = por %p278, %p279
    %p281 = scmp.ne.s32.totalorder %s269, %s270
    %p282 = scmp.eq.s32.totalorder %s29, 1
    %p283 = por %p281, %p282
    %p285 = scmp.ne.s32.totalorder %s270, %s284
    %p286 = scmp.eq.s32.totalorder %s29, 0
    %p287 = por %p285, %p286
    %s289 = sadd.s32 %s288, 1
    %p292 = scmp.eq.s32.totalorder %s23, 1
    %p293 = scmp.ne.s32.totalorder %s288, %s290
    %p294 = scmp.eq.s32.totalorder %s23, 0
    %p295 = por %p293, %p294
    %p296 = scmp.ne.s32.totalorder %s288, %s290
    %p297 = scmp.eq.s32.totalorder %s28, 1
    %p298 = por %p296, %p297
    %p299 = scmp.ne.s32.totalorder %s290, %s291
    %p300 = scmp.eq.s32.totalorder %s28, 0
    %p301 = por %p299, %p300
    %p302 = scmp.ne.s32.totalorder %s290, %s291
    %p303 = scmp.eq.s32.totalorder %s29, 1
    %p304 = por %p302, %p303
    %p306 = scmp.ne.s32.totalorder %s291, %s305
    %p307 = scmp.eq.s32.totalorder %s29, 0
    %p308 = por %p306, %p307
    %s310 = sadd.s32 %s309, 1
    %p313 = scmp.eq.s32.totalorder %s23, 1
    %p314 = scmp.ne.s32.totalorder %s309, %s311
    %p315 = scmp.eq.s32.totalorder %s23, 0
    %p316 = por %p314, %p315
    %p317 = scmp.ne.s32.totalorder %s309, %s311
    %p318 = scmp.eq.s32.totalorder %s28, 1
    %p319 = por %p317, %p318
    %p320 = scmp.ne.s32.totalorder %s311, %s312
    %p321 = scmp.eq.s32.totalorder %s28, 0
    %p322 = por %p320, %p321
    %p323 = scmp.ne.s32.totalorder %s311, %s312
    %p324 = scmp.eq.s32.totalorder %s29, 1
    %p325 = por %p323, %p324
    %p327 = scmp.ne.s32.totalorder %s312, %s326
    %p328 = scmp.eq.s32.totalorder %s29, 0
    %p329 = por %p327, %p328
    %s331 = sadd.s32 %s330, 1
    %p334 = scmp.eq.s32.totalorder %s23, 1
    %p335 = scmp.ne.s32.totalorder %s330, %s332
    %p336 = scmp.eq.s32.totalorder %s23, 0
    %p337 = por %p335, %p336
    %p338 = scmp.ne.s32.totalorder %s330, %s332
    %p339 = scmp.eq.s32.totalorder %s28, 1
    %p340 = por %p338, %p339
    %p341 = scmp.ne.s32.totalorder %s332, %s333
    %p342 = scmp.eq.s32.totalorder %s28, 0
    %p343 = por %p341, %p342
    %p344 = scmp.ne.s32.totalorder %s332, %s333
    %p345 = scmp.eq.s32.totalorder %s29, 1
    %p346 = por %p344, %p345
    %p348 = scmp.ne.s32.totalorder %s333, %s347
    %p349 = scmp.eq.s32.totalorder %s29, 0
    %p350 = por %p348, %p349
    %s352 = sadd.s32 %s351, 1
    %p355 = scmp.eq.s32.totalorder %s23, 1
    %p356 = scmp.ne.s32.totalorder %s351, %s353
    %p357 = scmp.eq.s32.totalorder %s23, 0
    %p358 = por %p356, %p357
    %p359 = scmp.ne.s32.totalorder %s351, %s353
    %p360 = scmp.eq.s32.totalorder %s28, 1
    %p361 = por %p359, %p360
    %p362 = scmp.ne.s32.totalorder %s353, %s354
    %p363 = scmp.eq.s32.totalorder %s28, 0
    %p364 = por %p362, %p363
    %p365 = scmp.ne.s32.totalorder %s353, %s354
    %p366 = scmp.eq.s32.totalorder %s29, 1
    %p367 = por %p365, %p366
    %p369 = scmp.ne.s32.totalorder %s354, %s368
    %p370 = scmp.eq.s32.totalorder %s29, 0
    %p371 = por %p369, %p370
    %s373 = sadd.s32 %s372, 1
    %p376 = scmp.eq.s32.totalorder %s23, 1
    %p377 = scmp.ne.s32.totalorder %s372, %s374
    %p378 = scmp.eq.s32.totalorder %s23, 0
    %p379 = por %p377, %p378
    %p380 = scmp.ne.s32.totalorder %s372, %s374
    %p381 = scmp.eq.s32.totalorder %s28, 1
    %p382 = por %p380, %p381
    %p383 = scmp.ne.s32.totalorder %s374, %s375
    %p384 = scmp.eq.s32.totalorder %s28, 0
    %p385 = por %p383, %p384
    %p386 = scmp.ne.s32.totalorder %s374, %s375
    %p387 = scmp.eq.s32.totalorder %s29, 1
    %p388 = por %p386, %p387
    %p390 = scmp.ne.s32.totalorder %s375, %s389
    %p391 = scmp.eq.s32.totalorder %s29, 0
    %p392 = por %p390, %p391
    %s393 = ssub.s32 %s23, %s30
    %p394 = scmp.eq.s32.totalorder %s393, 0
    %s396 = sadd.s32 %s395, 1
    %s397 = scalar_select %p394, %s395, %s396
    %p400 = pneg %p394
    %p401 = scmp.eq.s32.totalorder %s23, 1
    %p402 = por %p400, %p401
    %p403 = scmp.ne.s32.totalorder %s395, %s398
    %p404 = scmp.eq.s32.totalorder %s23, 0
    %p405 = por %p403, %p404
    %p406 = scmp.ne.s32.totalorder %s395, %s398
    %p407 = scmp.eq.s32.totalorder %s28, 1
    %p408 = por %p406, %p407
    %p409 = scmp.ne.s32.totalorder %s398, %s399
    %p410 = scmp.eq.s32.totalorder %s28, 0
    %p411 = por %p409, %p410
    %p412 = scmp.ne.s32.totalorder %s398, %s399
    %p413 = scmp.eq.s32.totalorder %s29, 1
    %p414 = por %p412, %p413
    %p416 = scmp.ne.s32.totalorder %s399, %s415
    %p417 = scmp.eq.s32.totalorder %s29, 0
    %p418 = por %p416, %p417
    %p419 = scmp.le.s32.totalorder 1, %s23
    %p420 = scmp.lt.s32.totalorder %s23, 3
    %p421 = pnand %p419, %p420
    %p422 = pneg %p421
    // Predicated region
    $region9: #{row_encoder_forward.1} parent=5 // pred_check
      _
    $region10: #{row_encoder_forward.1} parent=5 // pred_check_branch
      %424 = sbr.rel (%p421) target = $region12
    $region11: #{row_encoder_forward.1} parent=5 // pred_region
      %s425 = ssub.s32 %s23, 1
      // Predicated region
      $region13: #{row_encoder_forward.1} parent=11 // pred_check
        %p426 = pneg %p70
      $region14: #{row_encoder_forward.1} parent=11 // pred_check_branch
        %428 = sbr.rel (%p426) target = $region16
      $region15: #{row_encoder_forward.1} parent=11 // pred_region
        _
      $region16: #{row_encoder_forward.1} parent=11 // pred_fallthru
        _
      // Predicated region
      $region17: #{row_encoder_forward.1} parent=11 // pred_check
        %p429 = pneg %p91
      $region18: #{row_encoder_forward.1} parent=11 // pred_check_branch
        %431 = sbr.rel (%p429) target = $region20
      $region19: #{row_encoder_forward.1} parent=11 // pred_region
        _
      $region20: #{row_encoder_forward.1} parent=11 // pred_fallthru
        _
      // Predicated region
      $region21: #{row_encoder_forward.1} parent=11 // pred_check
        %p432 = pneg %p112
      $region22: #{row_encoder_forward.1} parent=11 // pred_check_branch
        %434 = sbr.rel (%p432) target = $region24
      $region23: #{row_encoder_forward.1} parent=11 // pred_region
        _
      $region24: #{row_encoder_forward.1} parent=11 // pred_fallthru
        _
      // Predicated region
      $region25: #{row_encoder_forward.1} parent=11 // pred_check
        %p435 = pneg %p133
      $region26: #{row_encoder_forward.1} parent=11 // pred_check_branch
        %437 = sbr.rel (%p435) target = $region28
      $region27: #{row_encoder_forward.1} parent=11 // pred_region
        _
      $region28: #{row_encoder_forward.1} parent=11 // pred_fallthru
        _
      // Predicated region
      $region29: #{row_encoder_forward.1} parent=11 // pred_check
        %p438 = pneg %p154
      $region30: #{row_encoder_forward.1} parent=11 // pred_check_branch
        %440 = sbr.rel (%p438) target = $region32
      $region31: #{row_encoder_forward.1} parent=11 // pred_region
        _
      $region32: #{row_encoder_forward.1} parent=11 // pred_fallthru
        _
      // Predicated region
      $region33: #{row_encoder_forward.1} parent=11 // pred_check
        %p441 = pneg %p175
      $region34: #{row_encoder_forward.1} parent=11 // pred_check_branch
        %443 = sbr.rel (%p441) target = $region36
      $region35: #{row_encoder_forward.1} parent=11 // pred_region
        _
      $region36: #{row_encoder_forward.1} parent=11 // pred_fallthru
        _
      // Predicated region
      $region37: #{row_encoder_forward.1} parent=11 // pred_check
        %p444 = pneg %p196
      $region38: #{row_encoder_forward.1} parent=11 // pred_check_branch
        %446 = sbr.rel (%p444) target = $region40
      $region39: #{row_encoder_forward.1} parent=11 // pred_region
        _
      $region40: #{row_encoder_forward.1} parent=11 // pred_fallthru
        _
      // Predicated region
      $region41: #{row_encoder_forward.1} parent=11 // pred_check
        %p447 = pneg %p217
      $region42: #{row_encoder_forward.1} parent=11 // pred_check_branch
        %449 = sbr.rel (%p447) target = $region44
      $region43: #{row_encoder_forward.1} parent=11 // pred_region
        _
      $region44: #{row_encoder_forward.1} parent=11 // pred_fallthru
        _
      // Predicated region
      $region45: #{row_encoder_forward.1} parent=11 // pred_check
        %p450 = pneg %p238
      $region46: #{row_encoder_forward.1} parent=11 // pred_check_branch
        %452 = sbr.rel (%p450) target = $region48
      $region47: #{row_encoder_forward.1} parent=11 // pred_region
        _
      $region48: #{row_encoder_forward.1} parent=11 // pred_fallthru
        _
      // Predicated region
      $region49: #{row_encoder_forward.1} parent=11 // pred_check
        %p453 = pneg %p259
      $region50: #{row_encoder_forward.1} parent=11 // pred_check_branch
        %455 = sbr.rel (%p453) target = $region52
      $region51: #{row_encoder_forward.1} parent=11 // pred_region
        _
      $region52: #{row_encoder_forward.1} parent=11 // pred_fallthru
        _
      // Predicated region
      $region53: #{row_encoder_forward.1} parent=11 // pred_check
        %p456 = pneg %p280
      $region54: #{row_encoder_forward.1} parent=11 // pred_check_branch
        %458 = sbr.rel (%p456) target = $region56
      $region55: #{row_encoder_forward.1} parent=11 // pred_region
        _
      $region56: #{row_encoder_forward.1} parent=11 // pred_fallthru
        _
      // Predicated region
      $region57: #{row_encoder_forward.1} parent=11 // pred_check
        %p459 = pneg %p301
      $region58: #{row_encoder_forward.1} parent=11 // pred_check_branch
        %461 = sbr.rel (%p459) target = $region60
      $region59: #{row_encoder_forward.1} parent=11 // pred_region
        _
      $region60: #{row_encoder_forward.1} parent=11 // pred_fallthru
        _
      // Predicated region
      $region61: #{row_encoder_forward.1} parent=11 // pred_check
        %p462 = pneg %p322
      $region62: #{row_encoder_forward.1} parent=11 // pred_check_branch
        %464 = sbr.rel (%p462) target = $region64
      $region63: #{row_encoder_forward.1} parent=11 // pred_region
        _
      $region64: #{row_encoder_forward.1} parent=11 // pred_fallthru
        _
      // Predicated region
      $region65: #{row_encoder_forward.1} parent=11 // pred_check
        %p465 = pneg %p343
      $region66: #{row_encoder_forward.1} parent=11 // pred_check_branch
        %467 = sbr.rel (%p465) target = $region68
      $region67: #{row_encoder_forward.1} parent=11 // pred_region
        _
      $region68: #{row_encoder_forward.1} parent=11 // pred_fallthru
        _
      // Predicated region
      $region69: #{row_encoder_forward.1} parent=11 // pred_check
        %p468 = pneg %p364
      $region70: #{row_encoder_forward.1} parent=11 // pred_check_branch
        %470 = sbr.rel (%p468) target = $region72
      $region71: #{row_encoder_forward.1} parent=11 // pred_region
        _
      $region72: #{row_encoder_forward.1} parent=11 // pred_fallthru
        _
      // Predicated region
      $region73: #{row_encoder_forward.1} parent=11 // pred_check
        %p471 = pneg %p385
      $region74: #{row_encoder_forward.1} parent=11 // pred_check_branch
        %473 = sbr.rel (%p471) target = $region76
      $region75: #{row_encoder_forward.1} parent=11 // pred_region
        _
      $region76: #{row_encoder_forward.1} parent=11 // pred_fallthru
        _
    $region12: #{row_encoder_forward.1} parent=5 // pred_fallthru
      _
    %p474 = scmp.lt.s32.totalorder %s23, 2
    // Predicated region
    $region77: #{row_encoder_forward.1} parent=5 // pred_check
      %p475 = pneg %p474
    $region78: #{row_encoder_forward.1} parent=5 // pred_check_branch
      %477 = sbr.rel (%p475) target = $region80
    $region79: #{row_encoder_forward.1} parent=5 // pred_region
      // Predicated region
      $region81: #{row_encoder_forward.1} parent=79 // pred_check
        %p478 = pneg %p43
      $region82: #{row_encoder_forward.1} parent=79 // pred_check_branch
        %480 = sbr.rel (%p478) target = $region84
      $region83: #{row_encoder_forward.1} parent=79 // pred_region
        %p481 = scmp.lt.s32.totalorder %s23, 1
        %s482 = scalar_select %p481, %s23, 1
        %s483 = smul.addr %s482, 4
        %s484 = scalar_lea.vmem %s0, %s483
      $region84: #{row_encoder_forward.1} parent=79 // pred_fallthru
        _
    $region80: #{row_encoder_forward.1} parent=5 // pred_fallthru
      _
    %p485 = scmp.le.s32.totalorder 1, %s23
    %p486 = scmp.lt.s32.totalorder %s23, 3
    %p487 = pnand %p485, %p486
    %p488 = pneg %p487
    // Predicated region
    $region85: #{row_encoder_forward.1} parent=5 // pred_check
      _
    $region86: #{row_encoder_forward.1} parent=5 // pred_check_branch
      %490 = sbr.rel (%p487) target = $region88
    $region87: #{row_encoder_forward.1} parent=5 // pred_region
      %s491 = ssub.s32 %s23, 1
      %p492 = scmp.lt.s32.totalorder %s28, 1
      %s493 = scalar_select %p492, %s28, 1
      %s494 = smul.addr %s493, 4
      %s495 = scalar_lea.vmem %s0, %s494
      %p496 = pneg %p49
      %p497 = pneg %p46
      %p498 = pneg %p70
      %p499 = pneg %p67
      %p500 = pneg %p91
      %p501 = pneg %p88
      %p502 = pneg %p112
      %p503 = pneg %p109
      %p504 = pneg %p133
      %p505 = pneg %p130
      %p506 = pneg %p154
      %p507 = pneg %p151
      %p508 = pneg %p175
      %p509 = pneg %p172
      %p510 = pneg %p196
      %p511 = pneg %p193
      %p512 = pneg %p217
      %p513 = pneg %p214
      %p514 = pneg %p238
      %p515 = pneg %p235
      %p516 = pneg %p259
      %p517 = pneg %p256
      %p518 = pneg %p280
      %p519 = pneg %p277
      %p520 = pneg %p301
      %p521 = pneg %p298
      %p522 = pneg %p322
      %p523 = pneg %p319
      %p524 = pneg %p343
      %p525 = pneg %p340
      %p526 = pneg %p364
      %p527 = pneg %p361
      %p528 = pneg %p385
      %p529 = pneg %p382
      %p530 = pneg %p411
      %p531 = pneg %p408
      %p532 = scmp.lt.s32.totalorder %s28, 1
      %s533 = scalar_select %p532, %s28, 1
      %s534 = smul.addr %s533, 8
      %s535 = scalar_lea.vmem %s17, %s534
      %p536 = scmp.lt.s32.totalorder %s28, 1
      %s537 = scalar_select %p536, %s28, 1
      %s538 = smul.addr %s537, 4
      %s539 = scalar_lea.vmem %s0, %s538
      %p540 = scmp.lt.s32.totalorder %s28, 1
      %s541 = scalar_select %p540, %s28, 1
      %s542 = smul.addr %s541, 8
      %s543 = scalar_lea.vmem %s17, %s542
      %v545 = vld [vmem:[%s539] sm:$0xf]
      %v546 = vunpack.c.l.bf16 %v545
      %v547 = vld [vmem:[%s1] sm:$0xff]
      %v548 = vld [vmem:[%s1 + $0x8] sm:$0xff]
      %v549 = vld [vmem:[%s1 + $0x10] sm:$0xff]
      %v550 = vld [vmem:[%s1 + $0x18] sm:$0xff]
      %v551 = vld [vmem:[%s1 + $0x20] sm:$0xff]
      %v552 = vld [vmem:[%s1 + $0x28] sm:$0xff]
      %v553 = vld [vmem:[%s1 + $0x30] sm:$0xff]
      %v554 = vld [vmem:[%s1 + $0x38] sm:$0xff]
      %v555 = vld [vmem:[%s1 + $0x40] sm:$0xff]
      %v556 = vld [vmem:[%s1 + $0x48] sm:$0xff]
      %v557 = vld [vmem:[%s1 + $0x50] sm:$0xff]
      %v558 = vld [vmem:[%s1 + $0x58] sm:$0xff]
      %v559 = vld [vmem:[%s1 + $0x60] sm:$0xff]
      %v560 = vld [vmem:[%s1 + $0x68] sm:$0xff]
      %v561 = vld [vmem:[%s1 + $0x70] sm:$0xff]
      %v562 = vld [vmem:[%s1 + $0x78] sm:$0xff]
      %v563 = vld [vmem:[%s1 + $0x80] sm:$0xff]
      %v564 = vld [vmem:[%s1 + $0x88] sm:$0xff]
      %v565 = vld [vmem:[%s1 + $0x90] sm:$0xff]
      %v566 = vld [vmem:[%s1 + $0x98] sm:$0xff]
      %v567 = vld [vmem:[%s1 + $0xa0] sm:$0xff]
      %v568 = vld [vmem:[%s1 + $0xa8] sm:$0xff]
      %v569 = vld [vmem:[%s1 + $0xb0] sm:$0xff]
      %v570 = vld [vmem:[%s1 + $0xb8] sm:$0xff]
      %v571 = vld [vmem:[%s1 + $0xc0] sm:$0xff]
      %v572 = vld [vmem:[%s1 + $0xc8] sm:$0xff]
      %v573 = vld [vmem:[%s1 + $0xd0] sm:$0xff]
      %v574 = vld [vmem:[%s1 + $0xd8] sm:$0xff]
      %v575 = vld [vmem:[%s1 + $0xe0] sm:$0xff]
      %v576 = vld [vmem:[%s1 + $0xe8] sm:$0xff]
      %v577 = vld [vmem:[%s1 + $0xf0] sm:$0xff]
      %v578 = vld [vmem:[%s1 + $0xf8] sm:$0xff]
      %v579 = vld [vmem:[%s1 + $0x100] sm:$0xff]
      %v580 = vld [vmem:[%s1 + $0x108] sm:$0xff]
      %v581 = vld [vmem:[%s1 + $0x110] sm:$0xff]
      %v582 = vld [vmem:[%s1 + $0x118] sm:$0xff]
      %v583 = vld [vmem:[%s1 + $0x120] sm:$0xff]
      %v584 = vld [vmem:[%s1 + $0x128] sm:$0xff]
      %v585 = vld [vmem:[%s1 + $0x130] sm:$0xff]
      %v586 = vld [vmem:[%s1 + $0x138] sm:$0xff]
      %v587 = vld [vmem:[%s1 + $0x140] sm:$0xff]
      %v588 = vld [vmem:[%s1 + $0x148] sm:$0xff]
      %v589 = vld [vmem:[%s1 + $0x150] sm:$0xff]
      %v590 = vld [vmem:[%s1 + $0x158] sm:$0xff]
      %v591 = vld [vmem:[%s1 + $0x160] sm:$0xff]
      %v592 = vld [vmem:[%s1 + $0x168] sm:$0xff]
      %v593 = vld [vmem:[%s1 + $0x170] sm:$0xff]
      %v594 = vld [vmem:[%s1 + $0x178] sm:$0xff]
      %v595 = vld [vmem:[%s1 + $0x180] sm:$0xff]
      %v596 = vld [vmem:[%s1 + $0x188] sm:$0xff]
      %v597 = vld [vmem:[%s1 + $0x190] sm:$0xff]
      %v598 = vld [vmem:[%s1 + $0x198] sm:$0xff]
      %v599 = vld [vmem:[%s1 + $0x1a0] sm:$0xff]
      %v600 = vld [vmem:[%s1 + $0x1a8] sm:$0xff]
      %v601 = vld [vmem:[%s1 + $0x1b0] sm:$0xff]
      %v602 = vld [vmem:[%s1 + $0x1b8] sm:$0xff]
      %v603 = vld [vmem:[%s1 + $0x1c0] sm:$0xff]
      %v604 = vld [vmem:[%s1 + $0x1c8] sm:$0xff]
      %v605 = vld [vmem:[%s1 + $0x1d0] sm:$0xff]
      %v606 = vld [vmem:[%s1 + $0x1d8] sm:$0xff]
      %v607 = vld [vmem:[%s1 + $0x1e0] sm:$0xff]
      %v608 = vld [vmem:[%s1 + $0x1e8] sm:$0xff]
      %v609 = vld [vmem:[%s1 + $0x1f0] sm:$0xff]
      %v610 = vld [vmem:[%s1 + $0x1f8] sm:$0xff]
      %v611 = vld [vmem:[%s1 + $0x200] sm:$0xff]
      %v612 = vld [vmem:[%s1 + $0x208] sm:$0xff]
      %v613 = vld [vmem:[%s1 + $0x210] sm:$0xff]
      %v614 = vld [vmem:[%s1 + $0x218] sm:$0xff]
      %v615 = vld [vmem:[%s1 + $0x220] sm:$0xff]
      %v616 = vld [vmem:[%s1 + $0x228] sm:$0xff]
      %v617 = vld [vmem:[%s1 + $0x230] sm:$0xff]
      %v618 = vld [vmem:[%s1 + $0x238] sm:$0xff]
      %v619 = vld [vmem:[%s1 + $0x240] sm:$0xff]
      %v620 = vld [vmem:[%s1 + $0x248] sm:$0xff]
      %v621 = vld [vmem:[%s1 + $0x250] sm:$0xff]
      %v622 = vld [vmem:[%s1 + $0x258] sm:$0xff]
      %v623 = vld [vmem:[%s1 + $0x260] sm:$0xff]
      %v624 = vld [vmem:[%s1 + $0x268] sm:$0xff]
      %v625 = vld [vmem:[%s1 + $0x270] sm:$0xff]
      %v626 = vld [vmem:[%s1 + $0x278] sm:$0xff]
      %v627 = vld [vmem:[%s1 + $0x280] sm:$0xff]
      %v628 = vld [vmem:[%s1 + $0x288] sm:$0xff]
      %v629 = vld [vmem:[%s1 + $0x290] sm:$0xff]
      %v630 = vld [vmem:[%s1 + $0x298] sm:$0xff]
      %v631 = vld [vmem:[%s1 + $0x2a0] sm:$0xff]
      %v632 = vld [vmem:[%s1 + $0x2a8] sm:$0xff]
      %v633 = vld [vmem:[%s1 + $0x2b0] sm:$0xff]
      %v634 = vld [vmem:[%s1 + $0x2b8] sm:$0xff]
      %v635 = vld [vmem:[%s1 + $0x2c0] sm:$0xff]
      %v636 = vld [vmem:[%s1 + $0x2c8] sm:$0xff]
      %v637 = vld [vmem:[%s1 + $0x2d0] sm:$0xff]
      %v638 = vld [vmem:[%s1 + $0x2d8] sm:$0xff]
      %v639 = vld [vmem:[%s1 + $0x2e0] sm:$0xff]
      %v640 = vld [vmem:[%s1 + $0x2e8] sm:$0xff]
      %v641 = vld [vmem:[%s1 + $0x2f0] sm:$0xff]
      %v642 = vld [vmem:[%s1 + $0x2f8] sm:$0xff]
      %v643 = vld [vmem:[%s2] sm:$0xff]
      %v644 = vld [vmem:[%s2 + $0x8] sm:$0xf]
      %v647 = vlaneseq
      %v648 = vshrl.u32 %v647, 7
      %v649 = vsub.s32 0, %v648
      %v650 = vrot.slane %v643, %v649
      %v651 = vlaneseq
      %v652 = vshrl.u32 %v651, 7
      %v653 = vsub.s32 1, %v652
      %v654 = vrot.slane %v643, %v653
      %v655 = vlaneseq
      %v656 = vshrl.u32 %v655, 7
      %v657 = vsub.s32 2, %v656
      %v658 = vrot.slane %v643, %v657
      %v659 = vlaneseq
      %v660 = vshrl.u32 %v659, 7
      %v661 = vsub.s32 3, %v660
      %v662 = vrot.slane %v643, %v661
      %v663 = vlaneseq
      %v664 = vshrl.u32 %v663, 7
      %v665 = vsub.s32 4, %v664
      %v666 = vrot.slane %v643, %v665
      %v667 = vlaneseq
      %v668 = vshrl.u32 %v667, 7
      %v669 = vsub.s32 5, %v668
      %v670 = vrot.slane %v643, %v669
      %v671 = vlaneseq
      %v672 = vshrl.u32 %v671, 7
      %v673 = vsub.s32 6, %v672
      %v674 = vrot.slane %v643, %v673
      %v675 = vlaneseq
      %v676 = vshrl.u32 %v675, 7
      %v677 = vsub.s32 7, %v676
      %v678 = vrot.slane %v643, %v677
      %v679 = vlaneseq
      %v680 = vshrl.u32 %v679, 7
      %v681 = vsub.s32 0, %v680
      %v682 = vrot.slane %v644, %v681
      %v683 = vlaneseq
      %v684 = vshrl.u32 %v683, 7
      %v685 = vsub.s32 1, %v684
      %v686 = vrot.slane %v644, %v685
      %v687 = vlaneseq
      %v688 = vshrl.u32 %v687, 7
      %v689 = vsub.s32 2, %v688
      %v690 = vrot.slane %v644, %v689
      %v691 = vlaneseq
      %v692 = vshrl.u32 %v691, 7
      %v693 = vsub.s32 3, %v692
      %v694 = vrot.slane %v644, %v693
      %v803 = vunpack.c.l.b16 %v547
      %v804 = vunpack.c.h.b16 %v547
      %v805 = vunpack.c.l.b16 %v548
      %v806 = vunpack.c.h.b16 %v548
      %v807 = vunpack.c.l.b16 %v549
      %v808 = vunpack.c.h.b16 %v549
      %v809 = vunpack.c.l.b16 %v550
      %v810 = vunpack.c.h.b16 %v550
      %v811 = vunpack.c.l.b16 %v551
      %v812 = vunpack.c.h.b16 %v551
      %v813 = vunpack.c.l.b16 %v552
      %v814 = vunpack.c.h.b16 %v552
      %v815 = vunpack.c.l.b16 %v553
      %v816 = vunpack.c.h.b16 %v553
      %v817 = vunpack.c.l.b16 %v554
      %v818 = vunpack.c.h.b16 %v554
      %v819 = vunpack.c.l.b16 %v555
      %v820 = vunpack.c.h.b16 %v555
      %v821 = vunpack.c.l.b16 %v556
      %v822 = vunpack.c.h.b16 %v556
      %v823 = vunpack.c.l.b16 %v557
      %v824 = vunpack.c.h.b16 %v557
      %v825 = vunpack.c.l.b16 %v558
      %v826 = vunpack.c.h.b16 %v558
      %v827 = vunpack.c.l.b16 %v559
      %v828 = vunpack.c.h.b16 %v559
      %v829 = vunpack.c.l.b16 %v560
      %v830 = vunpack.c.h.b16 %v560
      %v831 = vunpack.c.l.b16 %v561
      %v832 = vunpack.c.h.b16 %v561
      %v833 = vunpack.c.l.b16 %v562
      %v834 = vunpack.c.h.b16 %v562
      %v835 = vunpack.c.l.b16 %v563
      %v836 = vunpack.c.h.b16 %v563
      %v837 = vunpack.c.l.b16 %v564
      %v838 = vunpack.c.h.b16 %v564
      %v839 = vunpack.c.l.b16 %v565
      %v840 = vunpack.c.h.b16 %v565
      %v841 = vunpack.c.l.b16 %v566
      %v842 = vunpack.c.h.b16 %v566
      %v843 = vunpack.c.l.b16 %v567
      %v844 = vunpack.c.h.b16 %v567
      %v845 = vunpack.c.l.b16 %v568
      %v846 = vunpack.c.h.b16 %v568
      %v847 = vunpack.c.l.b16 %v569
      %v848 = vunpack.c.h.b16 %v569
      %v849 = vunpack.c.l.b16 %v570
      %v850 = vunpack.c.h.b16 %v570
      %v851 = vunpack.c.l.b16 %v571
      %v852 = vunpack.c.h.b16 %v571
      %v853 = vunpack.c.l.b16 %v572
      %v854 = vunpack.c.h.b16 %v572
      %v855 = vunpack.c.l.b16 %v573
      %v856 = vunpack.c.h.b16 %v573
      %v857 = vunpack.c.l.b16 %v574
      %v858 = vunpack.c.h.b16 %v574
      %v859 = vunpack.c.l.b16 %v575
      %v860 = vunpack.c.h.b16 %v575
      %v861 = vunpack.c.l.b16 %v576
      %v862 = vunpack.c.h.b16 %v576
      %v863 = vunpack.c.l.b16 %v577
      %v864 = vunpack.c.h.b16 %v577
      %v865 = vunpack.c.l.b16 %v578
      %v866 = vunpack.c.h.b16 %v578
      %v867 = vunpack.c.l.b16 %v579
      %v868 = vunpack.c.h.b16 %v579
      %v869 = vunpack.c.l.b16 %v580
      %v870 = vunpack.c.h.b16 %v580
      %v871 = vunpack.c.l.b16 %v581
      %v872 = vunpack.c.h.b16 %v581
      %v873 = vunpack.c.l.b16 %v582
      %v874 = vunpack.c.h.b16 %v582
      %v875 = vunpack.c.l.b16 %v583
      %v876 = vunpack.c.h.b16 %v583
      %v877 = vunpack.c.l.b16 %v584
      %v878 = vunpack.c.h.b16 %v584
      %v879 = vunpack.c.l.b16 %v585
      %v880 = vunpack.c.h.b16 %v585
      %v881 = vunpack.c.l.b16 %v586
      %v882 = vunpack.c.h.b16 %v586
      %v883 = vunpack.c.l.b16 %v587
      %v884 = vunpack.c.h.b16 %v587
      %v885 = vunpack.c.l.b16 %v588
      %v886 = vunpack.c.h.b16 %v588
      %v887 = vunpack.c.l.b16 %v589
      %v888 = vunpack.c.h.b16 %v589
      %v889 = vunpack.c.l.b16 %v590
      %v890 = vunpack.c.h.b16 %v590
      %v891 = vunpack.c.l.b16 %v591
      %v892 = vunpack.c.h.b16 %v591
      %v893 = vunpack.c.l.b16 %v592
      %v894 = vunpack.c.h.b16 %v592
      %v895 = vunpack.c.l.b16 %v593
      %v896 = vunpack.c.h.b16 %v593
      %v897 = vunpack.c.l.b16 %v594
      %v898 = vunpack.c.h.b16 %v594
      %v899 = vunpack.c.l.b16 %v595
      %v900 = vunpack.c.h.b16 %v595
      %v901 = vunpack.c.l.b16 %v596
      %v902 = vunpack.c.h.b16 %v596
      %v903 = vunpack.c.l.b16 %v597
      %v904 = vunpack.c.h.b16 %v597
      %v905 = vunpack.c.l.b16 %v598
      %v906 = vunpack.c.h.b16 %v598
      %v907 = vunpack.c.l.b16 %v599
      %v908 = vunpack.c.h.b16 %v599
      %v909 = vunpack.c.l.b16 %v600
      %v910 = vunpack.c.h.b16 %v600
      %v911 = vunpack.c.l.b16 %v601
      %v912 = vunpack.c.h.b16 %v601
      %v913 = vunpack.c.l.b16 %v602
      %v914 = vunpack.c.h.b16 %v602
      %v915 = vunpack.c.l.b16 %v603
      %v916 = vunpack.c.h.b16 %v603
      %v917 = vunpack.c.l.b16 %v604
      %v918 = vunpack.c.h.b16 %v604
      %v919 = vunpack.c.l.b16 %v605
      %v920 = vunpack.c.h.b16 %v605
      %v921 = vunpack.c.l.b16 %v606
      %v922 = vunpack.c.h.b16 %v606
      %v923 = vunpack.c.l.b16 %v607
      %v924 = vunpack.c.h.b16 %v607
      %v925 = vunpack.c.l.b16 %v608
      %v926 = vunpack.c.h.b16 %v608
      %v927 = vunpack.c.l.b16 %v609
      %v928 = vunpack.c.h.b16 %v609
      %v929 = vunpack.c.l.b16 %v610
      %v930 = vunpack.c.h.b16 %v610
      %v931 = vunpack.c.l.b16 %v611
      %v932 = vunpack.c.h.b16 %v611
      %v933 = vunpack.c.l.b16 %v612
      %v934 = vunpack.c.h.b16 %v612
      %v935 = vunpack.c.l.b16 %v613
      %v936 = vunpack.c.h.b16 %v613
      %v937 = vunpack.c.l.b16 %v614
      %v938 = vunpack.c.h.b16 %v614
      %v939 = vunpack.c.l.b16 %v615
      %v940 = vunpack.c.h.b16 %v615
      %v941 = vunpack.c.l.b16 %v616
      %v942 = vunpack.c.h.b16 %v616
      %v943 = vunpack.c.l.b16 %v617
      %v944 = vunpack.c.h.b16 %v617
      %v945 = vunpack.c.l.b16 %v618
      %v946 = vunpack.c.h.b16 %v618
      %v947 = vunpack.c.l.b16 %v619
      %v948 = vunpack.c.h.b16 %v619
      %v949 = vunpack.c.l.b16 %v620
      %v950 = vunpack.c.h.b16 %v620
      %v951 = vunpack.c.l.b16 %v621
      %v952 = vunpack.c.h.b16 %v621
      %v953 = vunpack.c.l.b16 %v622
      %v954 = vunpack.c.h.b16 %v622
      %v955 = vunpack.c.l.b16 %v623
      %v956 = vunpack.c.h.b16 %v623
      %v957 = vunpack.c.l.b16 %v624
      %v958 = vunpack.c.h.b16 %v624
      %v959 = vunpack.c.l.b16 %v625
      %v960 = vunpack.c.h.b16 %v625
      %v961 = vunpack.c.l.b16 %v626
      %v962 = vunpack.c.h.b16 %v626
      %v963 = vunpack.c.l.b16 %v627
      %v964 = vunpack.c.h.b16 %v627
      %v965 = vunpack.c.l.b16 %v628
      %v966 = vunpack.c.h.b16 %v628
      %v967 = vunpack.c.l.b16 %v629
      %v968 = vunpack.c.h.b16 %v629
      %v969 = vunpack.c.l.b16 %v630
      %v970 = vunpack.c.h.b16 %v630
      %v971 = vunpack.c.l.b16 %v631
      %v972 = vunpack.c.h.b16 %v631
      %v973 = vunpack.c.l.b16 %v632
      %v974 = vunpack.c.h.b16 %v632
      %v975 = vunpack.c.l.b16 %v633
      %v976 = vunpack.c.h.b16 %v633
      %v977 = vunpack.c.l.b16 %v634
      %v978 = vunpack.c.h.b16 %v634
      %v979 = vunpack.c.l.b16 %v635
      %v980 = vunpack.c.h.b16 %v635
      %v981 = vunpack.c.l.b16 %v636
      %v982 = vunpack.c.h.b16 %v636
      %v983 = vunpack.c.l.b16 %v637
      %v984 = vunpack.c.h.b16 %v637
      %v985 = vunpack.c.l.b16 %v638
      %v986 = vunpack.c.h.b16 %v638
      %v987 = vunpack.c.l.b16 %v639
      %v988 = vunpack.c.h.b16 %v639
      %v989 = vunpack.c.l.b16 %v640
      %v990 = vunpack.c.h.b16 %v640
      %v991 = vunpack.c.l.b16 %v641
      %v992 = vunpack.c.h.b16 %v641
      %v993 = vunpack.c.l.b16 %v642
      %v994 = vunpack.c.h.b16 %v642
      %v995 = vpack.c.b16 %v815, %v803
      %v996 = vpack.c.b16 %v816, %v804
      %v997 = vpack.c.b16 %v817, %v805
      %v998 = vpack.c.b16 %v818, %v806
      %v999 = vpack.c.b16 %v819, %v807
      %v1000 = vpack.c.b16 %v820, %v808
      %v1001 = vpack.c.b16 %v821, %v809
      %v1002 = vpack.c.b16 %v822, %v810
      %v1003 = vpack.c.b16 %v823, %v811
      %v1004 = vpack.c.b16 %v824, %v812
      %v1005 = vpack.c.b16 %v825, %v813
      %v1006 = vpack.c.b16 %v826, %v814
      %v1007 = vpack.c.b16 %v839, %v827
      %v1008 = vpack.c.b16 %v840, %v828
      %v1009 = vpack.c.b16 %v841, %v829
      %v1010 = vpack.c.b16 %v842, %v830
      %v1011 = vpack.c.b16 %v843, %v831
      %v1012 = vpack.c.b16 %v844, %v832
      %v1013 = vpack.c.b16 %v845, %v833
      %v1014 = vpack.c.b16 %v846, %v834
      %v1015 = vpack.c.b16 %v847, %v835
      %v1016 = vpack.c.b16 %v848, %v836
      %v1017 = vpack.c.b16 %v849, %v837
      %v1018 = vpack.c.b16 %v850, %v838
      %v1019 = vpack.c.b16 %v863, %v851
      %v1020 = vpack.c.b16 %v864, %v852
      %v1021 = vpack.c.b16 %v865, %v853
      %v1022 = vpack.c.b16 %v866, %v854
      %v1023 = vpack.c.b16 %v867, %v855
      %v1024 = vpack.c.b16 %v868, %v856
      %v1025 = vpack.c.b16 %v869, %v857
      %v1026 = vpack.c.b16 %v870, %v858
      %v1027 = vpack.c.b16 %v871, %v859
      %v1028 = vpack.c.b16 %v872, %v860
      %v1029 = vpack.c.b16 %v873, %v861
      %v1030 = vpack.c.b16 %v874, %v862
      %v1031 = vpack.c.b16 %v887, %v875
      %v1032 = vpack.c.b16 %v888, %v876
      %v1033 = vpack.c.b16 %v889, %v877
      %v1034 = vpack.c.b16 %v890, %v878
      %v1035 = vpack.c.b16 %v891, %v879
      %v1036 = vpack.c.b16 %v892, %v880
      %v1037 = vpack.c.b16 %v893, %v881
      %v1038 = vpack.c.b16 %v894, %v882
      %v1039 = vpack.c.b16 %v895, %v883
      %v1040 = vpack.c.b16 %v896, %v884
      %v1041 = vpack.c.b16 %v897, %v885
      %v1042 = vpack.c.b16 %v898, %v886
      %v1043 = vpack.c.b16 %v911, %v899
      %v1044 = vpack.c.b16 %v912, %v900
      %v1045 = vpack.c.b16 %v913, %v901
      %v1046 = vpack.c.b16 %v914, %v902
      %v1047 = vpack.c.b16 %v915, %v903
      %v1048 = vpack.c.b16 %v916, %v904
      %v1049 = vpack.c.b16 %v917, %v905
      %v1050 = vpack.c.b16 %v918, %v906
      %v1051 = vpack.c.b16 %v919, %v907
      %v1052 = vpack.c.b16 %v920, %v908
      %v1053 = vpack.c.b16 %v921, %v909
      %v1054 = vpack.c.b16 %v922, %v910
      %v1055 = vpack.c.b16 %v935, %v923
      %v1056 = vpack.c.b16 %v936, %v924
      %v1057 = vpack.c.b16 %v937, %v925
      %v1058 = vpack.c.b16 %v938, %v926
      %v1059 = vpack.c.b16 %v939, %v927
      %v1060 = vpack.c.b16 %v940, %v928
      %v1061 = vpack.c.b16 %v941, %v929
      %v1062 = vpack.c.b16 %v942, %v930
      %v1063 = vpack.c.b16 %v943, %v931
      %v1064 = vpack.c.b16 %v944, %v932
      %v1065 = vpack.c.b16 %v945, %v933
      %v1066 = vpack.c.b16 %v946, %v934
      %v1067 = vpack.c.b16 %v959, %v947
      %v1068 = vpack.c.b16 %v960, %v948
      %v1069 = vpack.c.b16 %v961, %v949
      %v1070 = vpack.c.b16 %v962, %v950
      %v1071 = vpack.c.b16 %v963, %v951
      %v1072 = vpack.c.b16 %v964, %v952
      %v1073 = vpack.c.b16 %v965, %v953
      %v1074 = vpack.c.b16 %v966, %v954
      %v1075 = vpack.c.b16 %v967, %v955
      %v1076 = vpack.c.b16 %v968, %v956
      %v1077 = vpack.c.b16 %v969, %v957
      %v1078 = vpack.c.b16 %v970, %v958
      %v1079 = vpack.c.b16 %v983, %v971
      %v1080 = vpack.c.b16 %v984, %v972
      %v1081 = vpack.c.b16 %v985, %v973
      %v1082 = vpack.c.b16 %v986, %v974
      %v1083 = vpack.c.b16 %v987, %v975
      %v1084 = vpack.c.b16 %v988, %v976
      %v1085 = vpack.c.b16 %v989, %v977
      %v1086 = vpack.c.b16 %v990, %v978
      %v1087 = vpack.c.b16 %v991, %v979
      %v1088 = vpack.c.b16 %v992, %v980
      %v1089 = vpack.c.b16 %v993, %v981
      %v1090 = vpack.c.b16 %v994, %v982
      %1187 = vmatprep.subr.bf16.mxu0 %v996
      %1188 = vmatpush1.bf16.msra.mxu0 %v995
      %1189 = vmatprep.subr.bf16.mxu0 %v1008
      %1190 = vmatpush1.bf16.msra.mxu0 %v1007
      %1191 = vmatprep.subr.bf16.mxu0 %v1020
      %1192 = vmatpush1.bf16.msra.mxu0 %v1019
      %1193 = vmatprep.subr.bf16.mxu0 %v1032
      %1194 = vmatpush1.bf16.msra.mxu0 %v1031
      %1195 = vmatprep.subr.bf16.mxu0 %v1044
      %1196 = vmatpush1.bf16.msra.mxu0 %v1043
      %1197 = vmatprep.subr.bf16.mxu0 %v1056
      %1198 = vmatpush1.bf16.msra.mxu0 %v1055
      %1199 = vmatprep.subr.bf16.mxu0 %v1068
      %1200 = vmatpush1.bf16.msra.mxu0 %v1067
      %1201 = vmatprep.subr.bf16.mxu0 %v1080
      %1202 = vmatpush1.bf16.msra.mxu0 %v1079
      %1203 = vmatprep.subr.bf16.mxu0 0
      %1204 = vmatpush1.bf16.msra.mxu0 0
      %1205 = vmatprep.subr.bf16.mxu0 0
      %1206 = vmatpush1.bf16.msra.mxu0 0
      %1207 = vmatprep.subr.bf16.mxu0 0
      %1208 = vmatpush1.bf16.msra.mxu0 0
      %1209 = vmatprep.subr.bf16.mxu0 0
      %1210 = vmatpush1.bf16.msra.mxu0 0
      %1211 = vmatprep.subr.bf16.mxu0 0
      %1212 = vmatpush1.bf16.msra.mxu0 0
      %1213 = vmatprep.subr.bf16.mxu0 0
      %1214 = vmatpush1.bf16.msra.mxu0 0
      %1215 = vmatprep.subr.bf16.mxu0 0
      %1216 = vmatpush1.bf16.msra.mxu0 0
      %1217 = vmatprep.subr.bf16.mxu0 0
      %1218 = vmatpush1.bf16.msra.mxu0 0
      %1219 = vmatprep.mubr.bf16.mxu0 0
      %1220 = vmatmul.mubr.bf16.gmra.mrb[0].mxu0 %v545
      %v1221 = vpop.f32.mrb[0].mxu0
      %v1222 = vadd.f32 %v650, %v1221
      %v1223 = vpop.f32.mrb[0].mxu0
      %v1224 = vadd.f32 %v654, %v1223
      %v1225 = vpop.f32.mrb[0].mxu0
      %v1226 = vpop.f32.mrb[0].mxu0
      %1227 = vdwg.mxu0
      %1228 = vmatprep.subr.bf16.mxu0 %v998
      %1229 = vmatpush1.bf16.msra.mxu0 %v997
      %1230 = vmatprep.subr.bf16.mxu0 %v1010
      %1231 = vmatpush1.bf16.msra.mxu0 %v1009
      %1232 = vmatprep.subr.bf16.mxu0 %v1022
      %1233 = vmatpush1.bf16.msra.mxu0 %v1021
      %1234 = vmatprep.subr.bf16.mxu0 %v1034
      %1235 = vmatpush1.bf16.msra.mxu0 %v1033
      %1236 = vmatprep.subr.bf16.mxu0 %v1046
      %1237 = vmatpush1.bf16.msra.mxu0 %v1045
      %1238 = vmatprep.subr.bf16.mxu0 %v1058
      %1239 = vmatpush1.bf16.msra.mxu0 %v1057
      %1240 = vmatprep.subr.bf16.mxu0 %v1070
      %1241 = vmatpush1.bf16.msra.mxu0 %v1069
      %1242 = vmatprep.subr.bf16.mxu0 %v1082
      %1243 = vmatpush1.bf16.msra.mxu0 %v1081
      %1244 = vmatprep.subr.bf16.mxu0 0
      %1245 = vmatpush1.bf16.msra.mxu0 0
      %1246 = vmatprep.subr.bf16.mxu0 0
      %1247 = vmatpush1.bf16.msra.mxu0 0
      %1248 = vmatprep.subr.bf16.mxu0 0
      %1249 = vmatpush1.bf16.msra.mxu0 0
      %1250 = vmatprep.subr.bf16.mxu0 0
      %1251 = vmatpush1.bf16.msra.mxu0 0
      %1252 = vmatprep.subr.bf16.mxu0 0
      %1253 = vmatpush1.bf16.msra.mxu0 0
      %1254 = vmatprep.subr.bf16.mxu0 0
      %1255 = vmatpush1.bf16.msra.mxu0 0
      %1256 = vmatprep.subr.bf16.mxu0 0
      %1257 = vmatpush1.bf16.msra.mxu0 0
      %1258 = vmatprep.subr.bf16.mxu0 0
      %1259 = vmatpush1.bf16.msra.mxu0 0
      %1260 = vmatprep.mubr.bf16.mxu0 0
      %1261 = vmatmul.mubr.bf16.gmra.mrb[0].mxu0 %v545
      %v1262 = vpop.f32.mrb[0].mxu0
      %v1263 = vadd.f32 %v658, %v1262
      %v1264 = vpop.f32.mrb[0].mxu0
      %v1265 = vadd.f32 %v662, %v1264
      %v1266 = vpop.f32.mrb[0].mxu0
      %v1267 = vpop.f32.mrb[0].mxu0
      %1268 = vdwg.mxu0
      %1269 = vmatprep.subr.bf16.mxu0 %v1000
      %1270 = vmatpush1.bf16.msra.mxu0 %v999
      %1271 = vmatprep.subr.bf16.mxu0 %v1012
      %1272 = vmatpush1.bf16.msra.mxu0 %v1011
      %1273 = vmatprep.subr.bf16.mxu0 %v1024
      %1274 = vmatpush1.bf16.msra.mxu0 %v1023
      %1275 = vmatprep.subr.bf16.mxu0 %v1036
      %1276 = vmatpush1.bf16.msra.mxu0 %v1035
      %1277 = vmatprep.subr.bf16.mxu0 %v1048
      %1278 = vmatpush1.bf16.msra.mxu0 %v1047
      %1279 = vmatprep.subr.bf16.mxu0 %v1060
      %1280 = vmatpush1.bf16.msra.mxu0 %v1059
      %1281 = vmatprep.subr.bf16.mxu0 %v1072
      %1282 = vmatpush1.bf16.msra.mxu0 %v1071
      %1283 = vmatprep.subr.bf16.mxu0 %v1084
      %1284 = vmatpush1.bf16.msra.mxu0 %v1083
      %1285 = vmatprep.subr.bf16.mxu0 0
      %1286 = vmatpush1.bf16.msra.mxu0 0
      %1287 = vmatprep.subr.bf16.mxu0 0
      %1288 = vmatpush1.bf16.msra.mxu0 0
      %1289 = vmatprep.subr.bf16.mxu0 0
      %1290 = vmatpush1.bf16.msra.mxu0 0
      %1291 = vmatprep.subr.bf16.mxu0 0
      %1292 = vmatpush1.bf16.msra.mxu0 0
      %1293 = vmatprep.subr.bf16.mxu0 0
      %1294 = vmatpush1.bf16.msra.mxu0 0
      %1295 = vmatprep.subr.bf16.mxu0 0
      %1296 = vmatpush1.bf16.msra.mxu0 0
      %1297 = vmatprep.subr.bf16.mxu0 0
      %1298 = vmatpush1.bf16.msra.mxu0 0
      %1299 = vmatprep.subr.bf16.mxu0 0
      %1300 = vmatpush1.bf16.msra.mxu0 0
      %1301 = vmatprep.mubr.bf16.mxu0 0
      %1302 = vmatmul.mubr.bf16.gmra.mrb[0].mxu0 %v545
      %v1303 = vpop.f32.mrb[0].mxu0
      %v1304 = vadd.f32 %v666, %v1303
      %v1305 = vpop.f32.mrb[0].mxu0
      %v1306 = vadd.f32 %v670, %v1305
      %v1307 = vpop.f32.mrb[0].mxu0
      %v1308 = vpop.f32.mrb[0].mxu0
      %1309 = vdwg.mxu0
      %1310 = vmatprep.subr.bf16.mxu0 %v1002
      %1311 = vmatpush1.bf16.msra.mxu0 %v1001
      %1312 = vmatprep.subr.bf16.mxu0 %v1014
      %1313 = vmatpush1.bf16.msra.mxu0 %v1013
      %1314 = vmatprep.subr.bf16.mxu0 %v1026
      %1315 = vmatpush1.bf16.msra.mxu0 %v1025
      %1316 = vmatprep.subr.bf16.mxu0 %v1038
      %1317 = vmatpush1.bf16.msra.mxu0 %v1037
      %1318 = vmatprep.subr.bf16.mxu0 %v1050
      %1319 = vmatpush1.bf16.msra.mxu0 %v1049
      %1320 = vmatprep.subr.bf16.mxu0 %v1062
      %1321 = vmatpush1.bf16.msra.mxu0 %v1061
      %1322 = vmatprep.subr.bf16.mxu0 %v1074
      %1323 = vmatpush1.bf16.msra.mxu0 %v1073
      %1324 = vmatprep.subr.bf16.mxu0 %v1086
      %1325 = vmatpush1.bf16.msra.mxu0 %v1085
      %1326 = vmatprep.subr.bf16.mxu0 0
      %1327 = vmatpush1.bf16.msra.mxu0 0
      %1328 = vmatprep.subr.bf16.mxu0 0
      %1329 = vmatpush1.bf16.msra.mxu0 0
      %1330 = vmatprep.subr.bf16.mxu0 0
      %1331 = vmatpush1.bf16.msra.mxu0 0
      %1332 = vmatprep.subr.bf16.mxu0 0
      %1333 = vmatpush1.bf16.msra.mxu0 0
      %1334 = vmatprep.subr.bf16.mxu0 0
      %1335 = vmatpush1.bf16.msra.mxu0 0
      %1336 = vmatprep.subr.bf16.mxu0 0
      %1337 = vmatpush1.bf16.msra.mxu0 0
      %1338 = vmatprep.subr.bf16.mxu0 0
      %1339 = vmatpush1.bf16.msra.mxu0 0
      %1340 = vmatprep.subr.bf16.mxu0 0
      %1341 = vmatpush1.bf16.msra.mxu0 0
      %1342 = vmatprep.mubr.bf16.mxu0 0
      %1343 = vmatmul.mubr.bf16.gmra.mrb[0].mxu0 %v545
      %v1344 = vpop.f32.mrb[0].mxu0
      %v1345 = vadd.f32 %v674, %v1344
      %v1346 = vpop.f32.mrb[0].mxu0
      %v1347 = vadd.f32 %v678, %v1346
      %v1348 = vpop.f32.mrb[0].mxu0
      %v1349 = vpop.f32.mrb[0].mxu0
      %1350 = vdwg.mxu0
      %1351 = vmatprep.subr.bf16.mxu0 %v1004
      %1352 = vmatpush1.bf16.msra.mxu0 %v1003
      %1353 = vmatprep.subr.bf16.mxu0 %v1016
      %1354 = vmatpush1.bf16.msra.mxu0 %v1015
      %1355 = vmatprep.subr.bf16.mxu0 %v1028
      %1356 = vmatpush1.bf16.msra.mxu0 %v1027
      %1357 = vmatprep.subr.bf16.mxu0 %v1040
      %1358 = vmatpush1.bf16.msra.mxu0 %v1039
      %1359 = vmatprep.subr.bf16.mxu0 %v1052
      %1360 = vmatpush1.bf16.msra.mxu0 %v1051
      %1361 = vmatprep.subr.bf16.mxu0 %v1064
      %1362 = vmatpush1.bf16.msra.mxu0 %v1063
      %1363 = vmatprep.subr.bf16.mxu0 %v1076
      %1364 = vmatpush1.bf16.msra.mxu0 %v1075
      %1365 = vmatprep.subr.bf16.mxu0 %v1088
      %1366 = vmatpush1.bf16.msra.mxu0 %v1087
      %1367 = vmatprep.subr.bf16.mxu0 0
      %1368 = vmatpush1.bf16.msra.mxu0 0
      %1369 = vmatprep.subr.bf16.mxu0 0
      %1370 = vmatpush1.bf16.msra.mxu0 0
      %1371 = vmatprep.subr.bf16.mxu0 0
      %1372 = vmatpush1.bf16.msra.mxu0 0
      %1373 = vmatprep.subr.bf16.mxu0 0
      %1374 = vmatpush1.bf16.msra.mxu0 0
      %1375 = vmatprep.subr.bf16.mxu0 0
      %1376 = vmatpush1.bf16.msra.mxu0 0
      %1377 = vmatprep.subr.bf16.mxu0 0
      %1378 = vmatpush1.bf16.msra.mxu0 0
      %1379 = vmatprep.subr.bf16.mxu0 0
      %1380 = vmatpush1.bf16.msra.mxu0 0
      %1381 = vmatprep.subr.bf16.mxu0 0
      %1382 = vmatpush1.bf16.msra.mxu0 0
      %1383 = vmatprep.mubr.bf16.mxu0 0
      %1384 = vmatmul.mubr.bf16.gmra.mrb[0].mxu0 %v545
      %v1385 = vpop.f32.mrb[0].mxu0
      %v1386 = vadd.f32 %v682, %v1385
      %v1387 = vpop.f32.mrb[0].mxu0
      %v1388 = vadd.f32 %v686, %v1387
      %v1389 = vpop.f32.mrb[0].mxu0
      %v1390 = vpop.f32.mrb[0].mxu0
      %1391 = vdwg.mxu0
      %1392 = vmatprep.subr.bf16.mxu0 %v1006
      %1393 = vmatpush1.bf16.msra.mxu0 %v1005
      %1394 = vmatprep.subr.bf16.mxu0 %v1018
      %1395 = vmatpush1.bf16.msra.mxu0 %v1017
      %1396 = vmatprep.subr.bf16.mxu0 %v1030
      %1397 = vmatpush1.bf16.msra.mxu0 %v1029
      %1398 = vmatprep.subr.bf16.mxu0 %v1042
      %1399 = vmatpush1.bf16.msra.mxu0 %v1041
      %1400 = vmatprep.subr.bf16.mxu0 %v1054
      %1401 = vmatpush1.bf16.msra.mxu0 %v1053
      %1402 = vmatprep.subr.bf16.mxu0 %v1066
      %1403 = vmatpush1.bf16.msra.mxu0 %v1065
      %1404 = vmatprep.subr.bf16.mxu0 %v1078
      %1405 = vmatpush1.bf16.msra.mxu0 %v1077
      %1406 = vmatprep.subr.bf16.mxu0 %v1090
      %1407 = vmatpush1.bf16.msra.mxu0 %v1089
      %1408 = vmatprep.subr.bf16.mxu0 0
      %1409 = vmatpush1.bf16.msra.mxu0 0
      %1410 = vmatprep.subr.bf16.mxu0 0
      %1411 = vmatpush1.bf16.msra.mxu0 0
      %1412 = vmatprep.subr.bf16.mxu0 0
      %1413 = vmatpush1.bf16.msra.mxu0 0
      %1414 = vmatprep.subr.bf16.mxu0 0
      %1415 = vmatpush1.bf16.msra.mxu0 0
      %1416 = vmatprep.subr.bf16.mxu0 0
      %1417 = vmatpush1.bf16.msra.mxu0 0
      %1418 = vmatprep.subr.bf16.mxu0 0
      %1419 = vmatpush1.bf16.msra.mxu0 0
      %1420 = vmatprep.subr.bf16.mxu0 0
      %1421 = vmatpush1.bf16.msra.mxu0 0
      %1422 = vmatprep.subr.bf16.mxu0 0
      %1423 = vmatpush1.bf16.msra.mxu0 0
      %1424 = vmatprep.mubr.bf16.mxu0 0
      %1425 = vmatmul.mubr.bf16.gmra.mrb[0].mxu0 %v545
      %v1426 = vpop.f32.mrb[0].mxu0
      %v1427 = vadd.f32 %v690, %v1426
      %v1428 = vpop.f32.mrb[0].mxu0
      %v1429 = vadd.f32 %v694, %v1428
      %v1430 = vpop.f32.mrb[0].mxu0
      %v1431 = vpop.f32.mrb[0].mxu0
      %1432 = vdwg.mxu0
      %v1433 = vmul.f32 %v1222, %v1304
      %v1434 = vmul.f32 %v1224, %v1306
      %v1435 = vmul.f32 %v1263, %v1345
      %v1436 = vmul.f32 %v1265, %v1347
      %v1437 = vadd.f32 %v1433, %v1434
      %v1438 = vadd.f32 %v1435, %v1436
      %v1439 = vadd.f32 %v1437, %v1438
      %1440 = vmax.xlane.f32.xlu0 %v1439
      %v1441 = vpop.xlane.xlu0 %1440
      %v1442 = vsub.f32 %v1439, %v1441
      %v1443 = vmul.f32 %v1442, 1.442695
      %v1444 = vpow.pop %v1443
      %v1445 = vld [vmem:[%s3] sm:$0xff]
      %v1446 = vld [vmem:[%s3 + $0x8] sm:$0xff]
      %v1447 = vld [vmem:[%s3 + $0x10] sm:$0xf]
      %v1448 = vld [vmem:[%s3 + $0x14] sm:$0xff]
      %v1449 = vld [vmem:[%s3 + $0x1c] sm:$0xff]
      %v1450 = vld [vmem:[%s3 + $0x24] sm:$0xf]
      %v1451 = vld [vmem:[%s3 + $0x28] sm:$0xff]
      %v1452 = vld [vmem:[%s3 + $0x30] sm:$0xff]
      %v1453 = vld [vmem:[%s3 + $0x38] sm:$0xf]
      %v1454 = vld [vmem:[%s3 + $0x3c] sm:$0xff]
      %v1455 = vld [vmem:[%s3 + $0x44] sm:$0xff]
      %v1456 = vld [vmem:[%s3 + $0x4c] sm:$0xf]
      %v1457 = vld [vmem:[%s3 + $0x50] sm:$0xff]
      %v1458 = vld [vmem:[%s3 + $0x58] sm:$0xff]
      %v1459 = vld [vmem:[%s3 + $0x60] sm:$0xf]
      %v1460 = vld [vmem:[%s3 + $0x64] sm:$0xff]
      %v1461 = vld [vmem:[%s3 + $0x6c] sm:$0xff]
      %v1462 = vld [vmem:[%s3 + $0x74] sm:$0xf]
      %v1463 = vld [vmem:[%s3 + $0x78] sm:$0xff]
      %v1464 = vld [vmem:[%s3 + $0x80] sm:$0xff]
      %v1465 = vld [vmem:[%s3 + $0x88] sm:$0xf]
      %v1466 = vld [vmem:[%s3 + $0x8c] sm:$0xff]
      %v1467 = vld [vmem:[%s3 + $0x94] sm:$0xff]
      %v1468 = vld [vmem:[%s3 + $0x9c] sm:$0xf]
      %v1469 = vld [vmem:[%s3 + $0xa0] sm:$0xff]
      %v1470 = vld [vmem:[%s3 + $0xa8] sm:$0xff]
      %v1471 = vld [vmem:[%s3 + $0xb0] sm:$0xf]
      %v1472 = vld [vmem:[%s3 + $0xb4] sm:$0xff]
      %v1473 = vld [vmem:[%s3 + $0xbc] sm:$0xff]
      %v1474 = vld [vmem:[%s3 + $0xc4] sm:$0xf]
      %v1475 = vld [vmem:[%s3 + $0xc8] sm:$0xff]
      %v1476 = vld [vmem:[%s3 + $0xd0] sm:$0xff]
      %v1477 = vld [vmem:[%s3 + $0xd8] sm:$0xf]
      %v1478 = vld [vmem:[%s3 + $0xdc] sm:$0xff]
      %v1479 = vld [vmem:[%s3 + $0xe4] sm:$0xff]
      %v1480 = vld [vmem:[%s3 + $0xec] sm:$0xf]
      %v1481 = vld [vmem:[%s3 + $0xf0] sm:$0xff]
      %v1482 = vld [vmem:[%s3 + $0xf8] sm:$0xff]
      %v1483 = vld [vmem:[%s3 + $0x100] sm:$0xf]
      %v1484 = vld [vmem:[%s3 + $0x104] sm:$0xff]
      %v1485 = vld [vmem:[%s3 + $0x10c] sm:$0xff]
      %v1486 = vld [vmem:[%s3 + $0x114] sm:$0xf]
      %v1487 = vld [vmem:[%s3 + $0x118] sm:$0xff]
      %v1488 = vld [vmem:[%s3 + $0x120] sm:$0xff]
      %v1489 = vld [vmem:[%s3 + $0x128] sm:$0xf]
      %v1490 = vld [vmem:[%s3 + $0x12c] sm:$0xff]
      %v1491 = vld [vmem:[%s3 + $0x134] sm:$0xff]
      %v1492 = vld [vmem:[%s3 + $0x13c] sm:$0xf]
      %v1493 = vpack.c.bf16 %v1444, %v1444
      %v1542 = vunpack.c.l.b16 %v1445
      %v1543 = vunpack.c.h.b16 %v1445
      %v1544 = vunpack.c.l.b16 %v1446
      %v1545 = vunpack.c.h.b16 %v1446
      %v1546 = vunpack.c.l.b16 %v1447
      %v1547 = vunpack.c.l.b16 %v1448
      %v1548 = vunpack.c.h.b16 %v1448
      %v1549 = vunpack.c.l.b16 %v1449
      %v1550 = vunpack.c.h.b16 %v1449
      %v1551 = vunpack.c.l.b16 %v1450
      %v1552 = vunpack.c.l.b16 %v1451
      %v1553 = vunpack.c.h.b16 %v1451
      %v1554 = vunpack.c.l.b16 %v1452
      %v1555 = vunpack.c.h.b16 %v1452
      %v1556 = vunpack.c.l.b16 %v1453
      %v1557 = vunpack.c.l.b16 %v1454
      %v1558 = vunpack.c.h.b16 %v1454
      %v1559 = vunpack.c.l.b16 %v1455
      %v1560 = vunpack.c.h.b16 %v1455
      %v1561 = vunpack.c.l.b16 %v1456
      %v1562 = vunpack.c.l.b16 %v1457
      %v1563 = vunpack.c.h.b16 %v1457
      %v1564 = vunpack.c.l.b16 %v1458
      %v1565 = vunpack.c.h.b16 %v1458
      %v1566 = vunpack.c.l.b16 %v1459
      %v1567 = vunpack.c.l.b16 %v1460
      %v1568 = vunpack.c.h.b16 %v1460
      %v1569 = vunpack.c.l.b16 %v1461
      %v1570 = vunpack.c.h.b16 %v1461
      %v1571 = vunpack.c.l.b16 %v1462
      %v1572 = vunpack.c.l.b16 %v1463
      %v1573 = vunpack.c.h.b16 %v1463
      %v1574 = vunpack.c.l.b16 %v1464
      %v1575 = vunpack.c.h.b16 %v1464
      %v1576 = vunpack.c.l.b16 %v1465
      %v1577 = vunpack.c.l.b16 %v1466
      %v1578 = vunpack.c.h.b16 %v1466
      %v1579 = vunpack.c.l.b16 %v1467
      %v1580 = vunpack.c.h.b16 %v1467
      %v1581 = vunpack.c.l.b16 %v1468
      %v1582 = vunpack.c.l.b16 %v1469
      %v1583 = vunpack.c.h.b16 %v1469
      %v1584 = vunpack.c.l.b16 %v1470
      %v1585 = vunpack.c.h.b16 %v1470
      %v1586 = vunpack.c.l.b16 %v1471
      %v1587 = vunpack.c.l.b16 %v1472
      %v1588 = vunpack.c.h.b16 %v1472
      %v1589 = vunpack.c.l.b16 %v1473
      %v1590 = vunpack.c.h.b16 %v1473
      %v1591 = vunpack.c.l.b16 %v1474
      %v1592 = vunpack.c.l.b16 %v1475
      %v1593 = vunpack.c.h.b16 %v1475
      %v1594 = vunpack.c.l.b16 %v1476
      %v1595 = vunpack.c.h.b16 %v1476
      %v1596 = vunpack.c.l.b16 %v1477
      %v1597 = vunpack.c.l.b16 %v1478
      %v1598 = vunpack.c.h.b16 %v1478
      %v1599 = vunpack.c.l.b16 %v1479
      %v1600 = vunpack.c.h.b16 %v1479
      %v1601 = vunpack.c.l.b16 %v1480
      %v1602 = vunpack.c.l.b16 %v1481
      %v1603 = vunpack.c.h.b16 %v1481
      %v1604 = vunpack.c.l.b16 %v1482
      %v1605 = vunpack.c.h.b16 %v1482
      %v1606 = vunpack.c.l.b16 %v1483
      %v1607 = vunpack.c.l.b16 %v1484
      %v1608 = vunpack.c.h.b16 %v1484
      %v1609 = vunpack.c.l.b16 %v1485
      %v1610 = vunpack.c.h.b16 %v1485
      %v1611 = vunpack.c.l.b16 %v1486
      %v1612 = vunpack.c.l.b16 %v1487
      %v1613 = vunpack.c.h.b16 %v1487
      %v1614 = vunpack.c.l.b16 %v1488
      %v1615 = vunpack.c.h.b16 %v1488
      %v1616 = vunpack.c.l.b16 %v1489
      %v1617 = vunpack.c.l.b16 %v1490
      %v1618 = vunpack.c.h.b16 %v1490
      %v1619 = vunpack.c.l.b16 %v1491
      %v1620 = vunpack.c.h.b16 %v1491
      %v1621 = vunpack.c.l.b16 %v1492
      %v1622 = vpack.c.b16 %v1547, %v1542
      %v1623 = vpack.c.b16 %v1548, %v1543
      %v1624 = vpack.c.b16 %v1549, %v1544
      %v1625 = vpack.c.b16 %v1550, %v1545
      %v1626 = vpack.c.b16 %v1551, %v1546
      %v1627 = vpack.c.b16 %v1557, %v1552
      %v1628 = vpack.c.b16 %v1558, %v1553
      %v1629 = vpack.c.b16 %v1559, %v1554
      %v1630 = vpack.c.b16 %v1560, %v1555
      %v1631 = vpack.c.b16 %v1561, %v1556
      %v1632 = vpack.c.b16 %v1567, %v1562
      %v1633 = vpack.c.b16 %v1568, %v1563
      %v1634 = vpack.c.b16 %v1569, %v1564
      %v1635 = vpack.c.b16 %v1570, %v1565
      %v1636 = vpack.c.b16 %v1571, %v1566
      %v1637 = vpack.c.b16 %v1577, %v1572
      %v1638 = vpack.c.b16 %v1578, %v1573
      %v1639 = vpack.c.b16 %v1579, %v1574
      %v1640 = vpack.c.b16 %v1580, %v1575
      %v1641 = vpack.c.b16 %v1581, %v1576
      %v1642 = vpack.c.b16 %v1587, %v1582
      %v1643 = vpack.c.b16 %v1588, %v1583
      %v1644 = vpack.c.b16 %v1589, %v1584
      %v1645 = vpack.c.b16 %v1590, %v1585
      %v1646 = vpack.c.b16 %v1591, %v1586
      %v1647 = vpack.c.b16 %v1597, %v1592
      %v1648 = vpack.c.b16 %v1598, %v1593
      %v1649 = vpack.c.b16 %v1599, %v1594
      %v1650 = vpack.c.b16 %v1600, %v1595
      %v1651 = vpack.c.b16 %v1601, %v1596
      %v1652 = vpack.c.b16 %v1607, %v1602
      %v1653 = vpack.c.b16 %v1608, %v1603
      %v1654 = vpack.c.b16 %v1609, %v1604
      %v1655 = vpack.c.b16 %v1610, %v1605
      %v1656 = vpack.c.b16 %v1611, %v1606
      %v1657 = vpack.c.b16 %v1617, %v1612
      %v1658 = vpack.c.b16 %v1618, %v1613
      %v1659 = vpack.c.b16 %v1619, %v1614
      %v1660 = vpack.c.b16 %v1620, %v1615
      %v1661 = vpack.c.b16 %v1621, %v1616
      %1702 = vmatprep.subr.bf16.mxu0 %v1623
      %1703 = vmatpush1.bf16.msra.mxu0 %v1622
      %1704 = vmatprep.subr.bf16.mxu0 %v1628
      %1705 = vmatpush1.bf16.msra.mxu0 %v1627
      %1706 = vmatprep.subr.bf16.mxu0 %v1633
      %1707 = vmatpush1.bf16.msra.mxu0 %v1632
      %1708 = vmatprep.subr.bf16.mxu0 %v1638
      %1709 = vmatpush1.bf16.msra.mxu0 %v1637
      %1710 = vmatprep.subr.bf16.mxu0 %v1643
      %1711 = vmatpush1.bf16.msra.mxu0 %v1642
      %1712 = vmatprep.subr.bf16.mxu0 %v1648
      %1713 = vmatpush1.bf16.msra.mxu0 %v1647
      %1714 = vmatprep.subr.bf16.mxu0 %v1653
      %1715 = vmatpush1.bf16.msra.mxu0 %v1652
      %1716 = vmatprep.subr.bf16.mxu0 %v1658
      %1717 = vmatpush1.bf16.msra.mxu0 %v1657
      %1718 = vmatprep.subr.bf16.mxu0 0
      %1719 = vmatpush1.bf16.msra.mxu0 0
      %1720 = vmatprep.subr.bf16.mxu0 0
      %1721 = vmatpush1.bf16.msra.mxu0 0
      %1722 = vmatprep.subr.bf16.mxu0 0
      %1723 = vmatpush1.bf16.msra.mxu0 0
      %1724 = vmatprep.subr.bf16.mxu0 0
      %1725 = vmatpush1.bf16.msra.mxu0 0
      %1726 = vmatprep.subr.bf16.mxu0 0
      %1727 = vmatpush1.bf16.msra.mxu0 0
      %1728 = vmatprep.subr.bf16.mxu0 0
      %1729 = vmatpush1.bf16.msra.mxu0 0
      %1730 = vmatprep.subr.bf16.mxu0 0
      %1731 = vmatpush1.bf16.msra.mxu0 0
      %1732 = vmatprep.subr.bf16.mxu0 0
      %1733 = vmatpush1.bf16.msra.mxu0 0
      %1734 = vmatprep.mubr.bf16.mxu0 0
      %1735 = vmatmul.mubr.bf16.gmra.mrb[0].mxu0 %v1493
      %v1736 = vpop.f32.mrb[0].mxu0
      %v1737 = vadd.f32 0.0, %v1736
      %v1738 = vpop.f32.mrb[0].mxu0
      %v1739 = vadd.f32 0.0, %v1738
      %v1740 = vpop.f32.mrb[0].mxu0
      %v1741 = vpop.f32.mrb[0].mxu0
      %1742 = vdwg.mxu0
      %1743 = vmatprep.subr.bf16.mxu0 %v1625
      %1744 = vmatpush1.bf16.msra.mxu0 %v1624
      %1745 = vmatprep.subr.bf16.mxu0 %v1630
      %1746 = vmatpush1.bf16.msra.mxu0 %v1629
      %1747 = vmatprep.subr.bf16.mxu0 %v1635
      %1748 = vmatpush1.bf16.msra.mxu0 %v1634
      %1749 = vmatprep.subr.bf16.mxu0 %v1640
      %1750 = vmatpush1.bf16.msra.mxu0 %v1639
      %1751 = vmatprep.subr.bf16.mxu0 %v1645
      %1752 = vmatpush1.bf16.msra.mxu0 %v1644
      %1753 = vmatprep.subr.bf16.mxu0 %v1650
      %1754 = vmatpush1.bf16.msra.mxu0 %v1649
      %1755 = vmatprep.subr.bf16.mxu0 %v1655
      %1756 = vmatpush1.bf16.msra.mxu0 %v1654
      %1757 = vmatprep.subr.bf16.mxu0 %v1660
      %1758 = vmatpush1.bf16.msra.mxu0 %v1659
      %1759 = vmatprep.subr.bf16.mxu0 0
      %1760 = vmatpush1.bf16.msra.mxu0 0
      %1761 = vmatprep.subr.bf16.mxu0 0
      %1762 = vmatpush1.bf16.msra.mxu0 0
      %1763 = vmatprep.subr.bf16.mxu0 0
      %1764 = vmatpush1.bf16.msra.mxu0 0
      %1765 = vmatprep.subr.bf16.mxu0 0
      %1766 = vmatpush1.bf16.msra.mxu0 0
      %1767 = vmatprep.subr.bf16.mxu0 0
      %1768 = vmatpush1.bf16.msra.mxu0 0
      %1769 = vmatprep.subr.bf16.mxu0 0
      %1770 = vmatpush1.bf16.msra.mxu0 0
      %1771 = vmatprep.subr.bf16.mxu0 0
      %1772 = vmatpush1.bf16.msra.mxu0 0
      %1773 = vmatprep.subr.bf16.mxu0 0
      %1774 = vmatpush1.bf16.msra.mxu0 0
      %1775 = vmatprep.mubr.bf16.mxu0 0
      %1776 = vmatmul.mubr.bf16.gmra.mrb[0].mxu0 %v1493
      %v1777 = vpop.f32.mrb[0].mxu0
      %v1778 = vadd.f32 0.0, %v1777
      %v1779 = vpop.f32.mrb[0].mxu0
      %v1780 = vadd.f32 0.0, %v1779
      %v1781 = vpop.f32.mrb[0].mxu0
      %v1782 = vpop.f32.mrb[0].mxu0
      %1783 = vdwg.mxu0
      %1784 = vmatprep.subr.bf16.mxu0 0
      %1785 = vmatpush1.bf16.msra.mxu0 %v1626
      %1786 = vmatprep.subr.bf16.mxu0 0
      %1787 = vmatpush1.bf16.msra.mxu0 %v1631
      %1788 = vmatprep.subr.bf16.mxu0 0
      %1789 = vmatpush1.bf16.msra.mxu0 %v1636
      %1790 = vmatprep.subr.bf16.mxu0 0
      %1791 = vmatpush1.bf16.msra.mxu0 %v1641
      %1792 = vmatprep.subr.bf16.mxu0 0
      %1793 = vmatpush1.bf16.msra.mxu0 %v1646
      %1794 = vmatprep.subr.bf16.mxu0 0
      %1795 = vmatpush1.bf16.msra.mxu0 %v1651
      %1796 = vmatprep.subr.bf16.mxu0 0
      %1797 = vmatpush1.bf16.msra.mxu0 %v1656
      %1798 = vmatprep.subr.bf16.mxu0 0
      %1799 = vmatpush1.bf16.msra.mxu0 %v1661
      %1800 = vmatprep.subr.bf16.mxu0 0
      %1801 = vmatpush1.bf16.msra.mxu0 0
      %1802 = vmatprep.subr.bf16.mxu0 0
      %1803 = vmatpush1.bf16.msra.mxu0 0
      %1804 = vmatprep.subr.bf16.mxu0 0
      %1805 = vmatpush1.bf16.msra.mxu0 0
      %1806 = vmatprep.subr.bf16.mxu0 0
      %1807 = vmatpush1.bf16.msra.mxu0 0
      %1808 = vmatprep.subr.bf16.mxu0 0
      %1809 = vmatpush1.bf16.msra.mxu0 0
      %1810 = vmatprep.subr.bf16.mxu0 0
      %1811 = vmatpush1.bf16.msra.mxu0 0
      %1812 = vmatprep.subr.bf16.mxu0 0
      %1813 = vmatpush1.bf16.msra.mxu0 0
      %1814 = vmatprep.subr.bf16.mxu0 0
      %1815 = vmatpush1.bf16.msra.mxu0 0
      %1816 = vmatprep.mubr.bf16.mxu0 0
      %1817 = vmatmul.mubr.bf16.gmra.mrb[0].mxu0 %v1493
      %v1818 = vpop.f32.mrb[0].mxu0
      %v1819 = vadd.f32 0.0, %v1818
      %v1820 = vpop.f32.mrb[0].mxu0
      %v1821 = vpop.f32.mrb[0].mxu0
      %v1822 = vpop.f32.mrb[0].mxu0
      %1823 = vdwg.mxu0
      %v1824 = vmul.f32 %v1737, %v1386
      %v1825 = vmul.f32 %v1739, %v1388
      %v1826 = vmul.f32 %v1778, %v1427
      %v1827 = vmul.f32 %v1780, %v1429
      %v1828 = vadd.f32 %v1824, %v1825
      %v1829 = vadd.f32 %v1826, %v1827
      %v1830 = vadd.f32 %v1828, %v1829
      %v1831 = vmax.f32 %v1819, 1e-30
      %v1832 = vrcp.pop %v1831
      %v1833 = vmul.f32 %v1830, %v1832
      %v1834 = vld [vmem:[%s4] sm:$0xf]
      %v1835 = vld [vmem:[%s4 + $0x4] sm:$0xf]
      %v1836 = vld [vmem:[%s4 + $0x8] sm:$0xf]
      %v1837 = vld [vmem:[%s4 + $0xc] sm:$0xf]
      %v1838 = vld [vmem:[%s4 + $0x10] sm:$0xf]
      %v1839 = vld [vmem:[%s4 + $0x14] sm:$0xf]
      %v1840 = vld [vmem:[%s4 + $0x18] sm:$0xf]
      %v1841 = vld [vmem:[%s4 + $0x1c] sm:$0xf]
      %v1842 = vld [vmem:[%s4 + $0x20] sm:$0xf]
      %v1843 = vld [vmem:[%s4 + $0x24] sm:$0xf]
      %v1844 = vld [vmem:[%s4 + $0x28] sm:$0xf]
      %v1845 = vld [vmem:[%s4 + $0x2c] sm:$0xf]
      %v1846 = vld [vmem:[%s4 + $0x30] sm:$0xf]
      %v1847 = vld [vmem:[%s4 + $0x34] sm:$0xf]
      %v1848 = vld [vmem:[%s4 + $0x38] sm:$0xf]
      %v1849 = vld [vmem:[%s4 + $0x3c] sm:$0xf]
      %v1850 = vpack.c.bf16 %v1833, %v1833
      %v1851 = vld [vmem:[%s5] sm:$0x1]
      %v1853 = vlaneseq
      %v1854 = vshrl.u32 %v1853, 7
      %v1855 = vsub.s32 0, %v1854
      %v1856 = vrot.slane %v1851, %v1855
      %v1874 = vunpack.c.l.b16 %v1834
      %v1875 = vunpack.c.l.b16 %v1835
      %v1876 = vunpack.c.l.b16 %v1836
      %v1877 = vunpack.c.l.b16 %v1837
      %v1878 = vunpack.c.l.b16 %v1838
      %v1879 = vunpack.c.l.b16 %v1839
      %v1880 = vunpack.c.l.b16 %v1840
      %v1881 = vunpack.c.l.b16 %v1841
      %v1882 = vunpack.c.l.b16 %v1842
      %v1883 = vunpack.c.l.b16 %v1843
      %v1884 = vunpack.c.l.b16 %v1844
      %v1885 = vunpack.c.l.b16 %v1845
      %v1886 = vunpack.c.l.b16 %v1846
      %v1887 = vunpack.c.l.b16 %v1847
      %v1888 = vunpack.c.l.b16 %v1848
      %v1889 = vunpack.c.l.b16 %v1849
      %v1890 = vpack.c.b16 %v1875, %v1874
      %v1891 = vpack.c.b16 %v1877, %v1876
      %v1892 = vpack.c.b16 %v1879, %v1878
      %v1893 = vpack.c.b16 %v1881, %v1880
      %v1894 = vpack.c.b16 %v1883, %v1882
      %v1895 = vpack.c.b16 %v1885, %v1884
      %v1896 = vpack.c.b16 %v1887, %v1886
      %v1897 = vpack.c.b16 %v1889, %v1888
      %1906 = vmatprep.subr.bf16.mxu0 0
      %1907 = vmatpush1.bf16.msra.mxu0 %v1890
      %1908 = vmatprep.subr.bf16.mxu0 0
      %1909 = vmatpush1.bf16.msra.mxu0 %v1891
      %1910 = vmatprep.subr.bf16.mxu0 0
      %1911 = vmatpush1.bf16.msra.mxu0 %v1892
      %1912 = vmatprep.subr.bf16.mxu0 0
      %1913 = vmatpush1.bf16.msra.mxu0 %v1893
      %1914 = vmatprep.subr.bf16.mxu0 0
      %1915 = vmatpush1.bf16.msra.mxu0 %v1894
      %1916 = vmatprep.subr.bf16.mxu0 0
      %1917 = vmatpush1.bf16.msra.mxu0 %v1895
      %1918 = vmatprep.subr.bf16.mxu0 0
      %1919 = vmatpush1.bf16.msra.mxu0 %v1896
      %1920 = vmatprep.subr.bf16.mxu0 0
      %1921 = vmatpush1.bf16.msra.mxu0 %v1897
      %1922 = vmatprep.subr.bf16.mxu0 0
      %1923 = vmatpush1.bf16.msra.mxu0 0
      %1924 = vmatprep.subr.bf16.mxu0 0
      %1925 = vmatpush1.bf16.msra.mxu0 0
      %1926 = vmatprep.subr.bf16.mxu0 0
      %1927 = vmatpush1.bf16.msra.mxu0 0
      %1928 = vmatprep.subr.bf16.mxu0 0
      %1929 = vmatpush1.bf16.msra.mxu0 0
      %1930 = vmatprep.subr.bf16.mxu0 0
      %1931 = vmatpush1.bf16.msra.mxu0 0
      %1932 = vmatprep.subr.bf16.mxu0 0
      %1933 = vmatpush1.bf16.msra.mxu0 0
      %1934 = vmatprep.subr.bf16.mxu0 0
      %1935 = vmatpush1.bf16.msra.mxu0 0
      %1936 = vmatprep.subr.bf16.mxu0 0
      %1937 = vmatpush1.bf16.msra.mxu0 0
      %1938 = vmatprep.mubr.bf16.mxu0 0
      %1939 = vmatmul.mubr.bf16.gmra.mrb[0].mxu0 %v1850
      %v1940 = vpop.f32.mrb[0].mxu0
      %v1941 = vadd.f32 %v1856, %v1940
      %v1942 = vpop.f32.mrb[0].mxu0
      %v1943 = vpop.f32.mrb[0].mxu0
      %v1944 = vpop.f32.mrb[0].mxu0
      %1945 = vdwg.mxu0
      %v1946 = vld [vmem:[%s6] sm:$0xf]
      %v1947 = vld [vmem:[%s6 + $0x4] sm:$0xf]
      %v1948 = vld [vmem:[%s6 + $0x8] sm:$0xf]
      %v1949 = vld [vmem:[%s6 + $0xc] sm:$0xf]
      %v1950 = vld [vmem:[%s6 + $0x10] sm:$0xf]
      %v1951 = vld [vmem:[%s6 + $0x14] sm:$0xf]
      %v1952 = vld [vmem:[%s6 + $0x18] sm:$0xf]
      %v1953 = vld [vmem:[%s6 + $0x1c] sm:$0xf]
      %v1954 = vld [vmem:[%s6 + $0x20] sm:$0xf]
      %v1955 = vld [vmem:[%s6 + $0x24] sm:$0xf]
      %v1956 = vld [vmem:[%s6 + $0x28] sm:$0xf]
      %v1957 = vld [vmem:[%s6 + $0x2c] sm:$0xf]
      %v1958 = vld [vmem:[%s6 + $0x30] sm:$0xf]
      %v1959 = vld [vmem:[%s6 + $0x34] sm:$0xf]
      %v1960 = vld [vmem:[%s6 + $0x38] sm:$0xf]
      %v1961 = vld [vmem:[%s6 + $0x3c] sm:$0xf]
      %v1962 = vadd.f32 %v546, %v1941
      %v1963 = vld [vmem:[%s7] sm:$0x1]
      %v1964 = vld [vmem:[%s8] sm:$0x1]
      %v1965 = vpack.c.bf16 %v1962, %v1962
      %v1982 = vunpack.c.l.b16 %v1946
      %v1983 = vunpack.c.l.b16 %v1947
      %v1984 = vunpack.c.l.b16 %v1948
      %v1985 = vunpack.c.l.b16 %v1949
      %v1986 = vunpack.c.l.b16 %v1950
      %v1987 = vunpack.c.l.b16 %v1951
      %v1988 = vunpack.c.l.b16 %v1952
      %v1989 = vunpack.c.l.b16 %v1953
      %v1990 = vunpack.c.l.b16 %v1954
      %v1991 = vunpack.c.l.b16 %v1955
      %v1992 = vunpack.c.l.b16 %v1956
      %v1993 = vunpack.c.l.b16 %v1957
      %v1994 = vunpack.c.l.b16 %v1958
      %v1995 = vunpack.c.l.b16 %v1959
      %v1996 = vunpack.c.l.b16 %v1960
      %v1997 = vunpack.c.l.b16 %v1961
      %v1998 = vpack.c.b16 %v1983, %v1982
      %v1999 = vpack.c.b16 %v1985, %v1984
      %v2000 = vpack.c.b16 %v1987, %v1986
      %v2001 = vpack.c.b16 %v1989, %v1988
      %v2002 = vpack.c.b16 %v1991, %v1990
      %v2003 = vpack.c.b16 %v1993, %v1992
      %v2004 = vpack.c.b16 %v1995, %v1994
      %v2005 = vpack.c.b16 %v1997, %v1996
      %2014 = vmatprep.subr.bf16.mxu0 0
      %2015 = vmatpush1.bf16.msra.mxu0 %v1998
      %2016 = vmatprep.subr.bf16.mxu0 0
      %2017 = vmatpush1.bf16.msra.mxu0 %v1999
      %2018 = vmatprep.subr.bf16.mxu0 0
      %2019 = vmatpush1.bf16.msra.mxu0 %v2000
      %2020 = vmatprep.subr.bf16.mxu0 0
      %2021 = vmatpush1.bf16.msra.mxu0 %v2001
      %2022 = vmatprep.subr.bf16.mxu0 0
      %2023 = vmatpush1.bf16.msra.mxu0 %v2002
      %2024 = vmatprep.subr.bf16.mxu0 0
      %2025 = vmatpush1.bf16.msra.mxu0 %v2003
      %2026 = vmatprep.subr.bf16.mxu0 0
      %2027 = vmatpush1.bf16.msra.mxu0 %v2004
      %2028 = vmatprep.subr.bf16.mxu0 0
      %2029 = vmatpush1.bf16.msra.mxu0 %v2005
      %2030 = vmatprep.subr.bf16.mxu0 0
      %2031 = vmatpush1.bf16.msra.mxu0 0
      %2032 = vmatprep.subr.bf16.mxu0 0
      %2033 = vmatpush1.bf16.msra.mxu0 0
      %2034 = vmatprep.subr.bf16.mxu0 0
      %2035 = vmatpush1.bf16.msra.mxu0 0
      %2036 = vmatprep.subr.bf16.mxu0 0
      %2037 = vmatpush1.bf16.msra.mxu0 0
      %2038 = vmatprep.subr.bf16.mxu0 0
      %2039 = vmatpush1.bf16.msra.mxu0 0
      %2040 = vmatprep.subr.bf16.mxu0 0
      %2041 = vmatpush1.bf16.msra.mxu0 0
      %2042 = vmatprep.subr.bf16.mxu0 0
      %2043 = vmatpush1.bf16.msra.mxu0 0
      %2044 = vmatprep.subr.bf16.mxu0 0
      %2045 = vmatpush1.bf16.msra.mxu0 0
      %2046 = vmatprep.mubr.bf16.mxu0 0
      %2047 = vmatmul.mubr.bf16.gmra.mrb[0].mxu0 %v1965
      %v2048 = vpop.f32.mrb[0].mxu0
      %v2049 = vadd.f32 0.0, %v2048
      %v2050 = vpop.f32.mrb[0].mxu0
      %v2051 = vpop.f32.mrb[0].mxu0
      %v2052 = vpop.f32.mrb[0].mxu0
      %2053 = vdwg.mxu0
      %v2054 = vmul.f32 %v1962, %v1962
      %v2055 = vpack.c.bf16 %v2054, %v2054
      %2056 = vmatprep.subr.bf16.mxu0 0
      %2057 = vmatpush1.bf16.msra.mxu0 %v1998
      %2058 = vmatprep.subr.bf16.mxu0 0
      %2059 = vmatpush1.bf16.msra.mxu0 %v1999
      %2060 = vmatprep.subr.bf16.mxu0 0
      %2061 = vmatpush1.bf16.msra.mxu0 %v2000
      %2062 = vmatprep.subr.bf16.mxu0 0
      %2063 = vmatpush1.bf16.msra.mxu0 %v2001
      %2064 = vmatprep.subr.bf16.mxu0 0
      %2065 = vmatpush1.bf16.msra.mxu0 %v2002
      %2066 = vmatprep.subr.bf16.mxu0 0
      %2067 = vmatpush1.bf16.msra.mxu0 %v2003
      %2068 = vmatprep.subr.bf16.mxu0 0
      %2069 = vmatpush1.bf16.msra.mxu0 %v2004
      %2070 = vmatprep.subr.bf16.mxu0 0
      %2071 = vmatpush1.bf16.msra.mxu0 %v2005
      %2072 = vmatprep.subr.bf16.mxu0 0
      %2073 = vmatpush1.bf16.msra.mxu0 0
      %2074 = vmatprep.subr.bf16.mxu0 0
      %2075 = vmatpush1.bf16.msra.mxu0 0
      %2076 = vmatprep.subr.bf16.mxu0 0
      %2077 = vmatpush1.bf16.msra.mxu0 0
      %2078 = vmatprep.subr.bf16.mxu0 0
      %2079 = vmatpush1.bf16.msra.mxu0 0
      %2080 = vmatprep.subr.bf16.mxu0 0
      %2081 = vmatpush1.bf16.msra.mxu0 0
      %2082 = vmatprep.subr.bf16.mxu0 0
      %2083 = vmatpush1.bf16.msra.mxu0 0
      %2084 = vmatprep.subr.bf16.mxu0 0
      %2085 = vmatpush1.bf16.msra.mxu0 0
      %2086 = vmatprep.subr.bf16.mxu0 0
      %2087 = vmatpush1.bf16.msra.mxu0 0
      %2088 = vmatprep.mubr.bf16.mxu0 0
      %2089 = vmatmul.mubr.bf16.gmra.mrb[0].mxu0 %v2055
      %v2090 = vpop.f32.mrb[0].mxu0
      %v2091 = vadd.f32 0.0, %v2090
      %v2092 = vpop.f32.mrb[0].mxu0
      %v2093 = vpop.f32.mrb[0].mxu0
      %v2094 = vpop.f32.mrb[0].mxu0
      %2095 = vdwg.mxu0
      %v2096 = vmul.f32 %v2049, %v2049
      %v2097 = vsub.f32 %v2091, %v2096
      %v2098 = vmax.f32 %v2097, 0.0
      %v2099 = vsub.f32 %v1962, %v2049
      %v2100 = vadd.f32 %v2098, 1e-05
      %v2101 = vrsqrt.pop %v2100
      %v2102 = vmul.f32 %v2099, %v2101
      %v2104 = vlaneseq
      %v2105 = vshrl.u32 %v2104, 7
      %v2106 = vsub.s32 0, %v2105
      %v2107 = vrot.slane %v1963, %v2106
      %v2109 = vmul.f32 %v2102, %v2107
      %v2111 = vlaneseq
      %v2112 = vshrl.u32 %v2111, 7
      %v2113 = vsub.s32 0, %v2112
      %v2114 = vrot.slane %v1964, %v2113
      %v2116 = vadd.f32 %v2109, %v2114
      %v2117 = vld [vmem:[%s9] sm:$0xf]
      %v2118 = vld [vmem:[%s9 + $0x4] sm:$0xf]
      %v2119 = vld [vmem:[%s9 + $0x8] sm:$0xf]
      %v2120 = vld [vmem:[%s9 + $0xc] sm:$0xf]
      %v2121 = vld [vmem:[%s9 + $0x10] sm:$0xf]
      %v2122 = vld [vmem:[%s9 + $0x14] sm:$0xf]
      %v2123 = vld [vmem:[%s9 + $0x18] sm:$0xf]
      %v2124 = vld [vmem:[%s9 + $0x1c] sm:$0xf]
      %v2125 = vld [vmem:[%s9 + $0x20] sm:$0xf]
      %v2126 = vld [vmem:[%s9 + $0x24] sm:$0xf]
      %v2127 = vld [vmem:[%s9 + $0x28] sm:$0xf]
      %v2128 = vld [vmem:[%s9 + $0x2c] sm:$0xf]
      %v2129 = vld [vmem:[%s9 + $0x30] sm:$0xf]
      %v2130 = vld [vmem:[%s9 + $0x34] sm:$0xf]
      %v2131 = vld [vmem:[%s9 + $0x38] sm:$0xf]
      %v2132 = vld [vmem:[%s9 + $0x3c] sm:$0xf]
      %v2133 = vpack.c.bf16 %v2116, %v2116
      %v2134 = vld [vmem:[%s10] sm:$0x1]
      %v2136 = vlaneseq
      %v2137 = vshrl.u32 %v2136, 7
      %v2138 = vsub.s32 0, %v2137
      %v2139 = vrot.slane %v2134, %v2138
      %v2157 = vunpack.c.l.b16 %v2117
      %v2158 = vunpack.c.l.b16 %v2118
      %v2159 = vunpack.c.l.b16 %v2119
      %v2160 = vunpack.c.l.b16 %v2120
      %v2161 = vunpack.c.l.b16 %v2121
      %v2162 = vunpack.c.l.b16 %v2122
      %v2163 = vunpack.c.l.b16 %v2123
      %v2164 = vunpack.c.l.b16 %v2124
      %v2165 = vunpack.c.l.b16 %v2125
      %v2166 = vunpack.c.l.b16 %v2126
      %v2167 = vunpack.c.l.b16 %v2127
      %v2168 = vunpack.c.l.b16 %v2128
      %v2169 = vunpack.c.l.b16 %v2129
      %v2170 = vunpack.c.l.b16 %v2130
      %v2171 = vunpack.c.l.b16 %v2131
      %v2172 = vunpack.c.l.b16 %v2132
      %v2173 = vpack.c.b16 %v2158, %v2157
      %v2174 = vpack.c.b16 %v2160, %v2159
      %v2175 = vpack.c.b16 %v2162, %v2161
      %v2176 = vpack.c.b16 %v2164, %v2163
      %v2177 = vpack.c.b16 %v2166, %v2165
      %v2178 = vpack.c.b16 %v2168, %v2167
      %v2179 = vpack.c.b16 %v2170, %v2169
      %v2180 = vpack.c.b16 %v2172, %v2171
      %2189 = vmatprep.subr.bf16.mxu0 0
      %2190 = vmatpush1.bf16.msra.mxu0 %v2173
      %2191 = vmatprep.subr.bf16.mxu0 0
      %2192 = vmatpush1.bf16.msra.mxu0 %v2174
      %2193 = vmatprep.subr.bf16.mxu0 0
      %2194 = vmatpush1.bf16.msra.mxu0 %v2175
      %2195 = vmatprep.subr.bf16.mxu0 0
      %2196 = vmatpush1.bf16.msra.mxu0 %v2176
      %2197 = vmatprep.subr.bf16.mxu0 0
      %2198 = vmatpush1.bf16.msra.mxu0 %v2177
      %2199 = vmatprep.subr.bf16.mxu0 0
      %2200 = vmatpush1.bf16.msra.mxu0 %v2178
      %2201 = vmatprep.subr.bf16.mxu0 0
      %2202 = vmatpush1.bf16.msra.mxu0 %v2179
      %2203 = vmatprep.subr.bf16.mxu0 0
      %2204 = vmatpush1.bf16.msra.mxu0 %v2180
      %2205 = vmatprep.subr.bf16.mxu0 0
      %2206 = vmatpush1.bf16.msra.mxu0 0
      %2207 = vmatprep.subr.bf16.mxu0 0
      %2208 = vmatpush1.bf16.msra.mxu0 0
      %2209 = vmatprep.subr.bf16.mxu0 0
      %2210 = vmatpush1.bf16.msra.mxu0 0
      %2211 = vmatprep.subr.bf16.mxu0 0
      %2212 = vmatpush1.bf16.msra.mxu0 0
      %2213 = vmatprep.subr.bf16.mxu0 0
      %2214 = vmatpush1.bf16.msra.mxu0 0
      %2215 = vmatprep.subr.bf16.mxu0 0
      %2216 = vmatpush1.bf16.msra.mxu0 0
      %2217 = vmatprep.subr.bf16.mxu0 0
      %2218 = vmatpush1.bf16.msra.mxu0 0
      %2219 = vmatprep.subr.bf16.mxu0 0
      %2220 = vmatpush1.bf16.msra.mxu0 0
      %2221 = vmatprep.mubr.bf16.mxu0 0
      %2222 = vmatmul.mubr.bf16.gmra.mrb[0].mxu0 %v2133
      %v2223 = vpop.f32.mrb[0].mxu0
      %v2224 = vadd.f32 %v2139, %v2223
      %v2225 = vpop.f32.mrb[0].mxu0
      %v2226 = vpop.f32.mrb[0].mxu0
      %v2227 = vpop.f32.mrb[0].mxu0
      %2228 = vdwg.mxu0
      %v2229 = vmax.f32 %v2224, 0.0
      %v2230 = vld [vmem:[%s11] sm:$0xf]
      %v2231 = vld [vmem:[%s11 + $0x4] sm:$0xf]
      %v2232 = vld [vmem:[%s11 + $0x8] sm:$0xf]
      %v2233 = vld [vmem:[%s11 + $0xc] sm:$0xf]
      %v2234 = vld [vmem:[%s11 + $0x10] sm:$0xf]
      %v2235 = vld [vmem:[%s11 + $0x14] sm:$0xf]
      %v2236 = vld [vmem:[%s11 + $0x18] sm:$0xf]
      %v2237 = vld [vmem:[%s11 + $0x1c] sm:$0xf]
      %v2238 = vld [vmem:[%s11 + $0x20] sm:$0xf]
      %v2239 = vld [vmem:[%s11 + $0x24] sm:$0xf]
      %v2240 = vld [vmem:[%s11 + $0x28] sm:$0xf]
      %v2241 = vld [vmem:[%s11 + $0x2c] sm:$0xf]
      %v2242 = vld [vmem:[%s11 + $0x30] sm:$0xf]
      %v2243 = vld [vmem:[%s11 + $0x34] sm:$0xf]
      %v2244 = vld [vmem:[%s11 + $0x38] sm:$0xf]
      %v2245 = vld [vmem:[%s11 + $0x3c] sm:$0xf]
      %v2246 = vpack.c.bf16 %v2229, %v2229
      %v2247 = vld [vmem:[%s12] sm:$0x1]
      %v2249 = vlaneseq
      %v2250 = vshrl.u32 %v2249, 7
      %v2251 = vsub.s32 0, %v2250
      %v2252 = vrot.slane %v2247, %v2251
      %v2270 = vunpack.c.l.b16 %v2230
      %v2271 = vunpack.c.l.b16 %v2231
      %v2272 = vunpack.c.l.b16 %v2232
      %v2273 = vunpack.c.l.b16 %v2233
      %v2274 = vunpack.c.l.b16 %v2234
      %v2275 = vunpack.c.l.b16 %v2235
      %v2276 = vunpack.c.l.b16 %v2236
      %v2277 = vunpack.c.l.b16 %v2237
      %v2278 = vunpack.c.l.b16 %v2238
      %v2279 = vunpack.c.l.b16 %v2239
      %v2280 = vunpack.c.l.b16 %v2240
      %v2281 = vunpack.c.l.b16 %v2241
      %v2282 = vunpack.c.l.b16 %v2242
      %v2283 = vunpack.c.l.b16 %v2243
      %v2284 = vunpack.c.l.b16 %v2244
      %v2285 = vunpack.c.l.b16 %v2245
      %v2286 = vpack.c.b16 %v2271, %v2270
      %v2287 = vpack.c.b16 %v2273, %v2272
      %v2288 = vpack.c.b16 %v2275, %v2274
      %v2289 = vpack.c.b16 %v2277, %v2276
      %v2290 = vpack.c.b16 %v2279, %v2278
      %v2291 = vpack.c.b16 %v2281, %v2280
      %v2292 = vpack.c.b16 %v2283, %v2282
      %v2293 = vpack.c.b16 %v2285, %v2284
      %2302 = vmatprep.subr.bf16.mxu0 0
      %2303 = vmatpush1.bf16.msra.mxu0 %v2286
      %2304 = vmatprep.subr.bf16.mxu0 0
      %2305 = vmatpush1.bf16.msra.mxu0 %v2287
      %2306 = vmatprep.subr.bf16.mxu0 0
      %2307 = vmatpush1.bf16.msra.mxu0 %v2288
      %2308 = vmatprep.subr.bf16.mxu0 0
      %2309 = vmatpush1.bf16.msra.mxu0 %v2289
      %2310 = vmatprep.subr.bf16.mxu0 0
      %2311 = vmatpush1.bf16.msra.mxu0 %v2290
      %2312 = vmatprep.subr.bf16.mxu0 0
      %2313 = vmatpush1.bf16.msra.mxu0 %v2291
      %2314 = vmatprep.subr.bf16.mxu0 0
      %2315 = vmatpush1.bf16.msra.mxu0 %v2292
      %2316 = vmatprep.subr.bf16.mxu0 0
      %2317 = vmatpush1.bf16.msra.mxu0 %v2293
      %2318 = vmatprep.subr.bf16.mxu0 0
      %2319 = vmatpush1.bf16.msra.mxu0 0
      %2320 = vmatprep.subr.bf16.mxu0 0
      %2321 = vmatpush1.bf16.msra.mxu0 0
      %2322 = vmatprep.subr.bf16.mxu0 0
      %2323 = vmatpush1.bf16.msra.mxu0 0
      %2324 = vmatprep.subr.bf16.mxu0 0
      %2325 = vmatpush1.bf16.msra.mxu0 0
      %2326 = vmatprep.subr.bf16.mxu0 0
      %2327 = vmatpush1.bf16.msra.mxu0 0
      %2328 = vmatprep.subr.bf16.mxu0 0
      %2329 = vmatpush1.bf16.msra.mxu0 0
      %2330 = vmatprep.subr.bf16.mxu0 0
      %2331 = vmatpush1.bf16.msra.mxu0 0
      %2332 = vmatprep.subr.bf16.mxu0 0
      %2333 = vmatpush1.bf16.msra.mxu0 0
      %2334 = vmatprep.mubr.bf16.mxu0 0
      %2335 = vmatmul.mubr.bf16.gmra.mrb[0].mxu0 %v2246
      %v2336 = vpop.f32.mrb[0].mxu0
      %v2337 = vadd.f32 %v2252, %v2336
      %v2338 = vpop.f32.mrb[0].mxu0
      %v2339 = vpop.f32.mrb[0].mxu0
      %v2340 = vpop.f32.mrb[0].mxu0
      %2341 = vdwg.mxu0
      %v2342 = vadd.f32 %v2116, %v2337
      %v2343 = vld [vmem:[%s13] sm:$0x1]
      %v2344 = vld [vmem:[%s14] sm:$0x1]
      %v2345 = vpack.c.bf16 %v2342, %v2342
      %2346 = vmatprep.subr.bf16.mxu0 0
      %2347 = vmatpush1.bf16.msra.mxu0 %v1998
      %2348 = vmatprep.subr.bf16.mxu0 0
      %2349 = vmatpush1.bf16.msra.mxu0 %v1999
      %2350 = vmatprep.subr.bf16.mxu0 0
      %2351 = vmatpush1.bf16.msra.mxu0 %v2000
      %2352 = vmatprep.subr.bf16.mxu0 0
      %2353 = vmatpush1.bf16.msra.mxu0 %v2001
      %2354 = vmatprep.subr.bf16.mxu0 0
      %2355 = vmatpush1.bf16.msra.mxu0 %v2002
      %2356 = vmatprep.subr.bf16.mxu0 0
      %2357 = vmatpush1.bf16.msra.mxu0 %v2003
      %2358 = vmatprep.subr.bf16.mxu0 0
      %2359 = vmatpush1.bf16.msra.mxu0 %v2004
      %2360 = vmatprep.subr.bf16.mxu0 0
      %2361 = vmatpush1.bf16.msra.mxu0 %v2005
      %2362 = vmatprep.subr.bf16.mxu0 0
      %2363 = vmatpush1.bf16.msra.mxu0 0
      %2364 = vmatprep.subr.bf16.mxu0 0
      %2365 = vmatpush1.bf16.msra.mxu0 0
      %2366 = vmatprep.subr.bf16.mxu0 0
      %2367 = vmatpush1.bf16.msra.mxu0 0
      %2368 = vmatprep.subr.bf16.mxu0 0
      %2369 = vmatpush1.bf16.msra.mxu0 0
      %2370 = vmatprep.subr.bf16.mxu0 0
      %2371 = vmatpush1.bf16.msra.mxu0 0
      %2372 = vmatprep.subr.bf16.mxu0 0
      %2373 = vmatpush1.bf16.msra.mxu0 0
      %2374 = vmatprep.subr.bf16.mxu0 0
      %2375 = vmatpush1.bf16.msra.mxu0 0
      %2376 = vmatprep.subr.bf16.mxu0 0
      %2377 = vmatpush1.bf16.msra.mxu0 0
      %2378 = vmatprep.mubr.bf16.mxu0 0
      %2379 = vmatmul.mubr.bf16.gmra.mrb[0].mxu0 %v2345
      %v2380 = vpop.f32.mrb[0].mxu0
      %v2381 = vadd.f32 0.0, %v2380
      %v2382 = vpop.f32.mrb[0].mxu0
      %v2383 = vpop.f32.mrb[0].mxu0
      %v2384 = vpop.f32.mrb[0].mxu0
      %2385 = vdwg.mxu0
      %v2386 = vmul.f32 %v2342, %v2342
      %v2387 = vpack.c.bf16 %v2386, %v2386
      %2388 = vmatprep.subr.bf16.mxu0 0
      %2389 = vmatpush1.bf16.msra.mxu0 %v1998
      %2390 = vmatprep.subr.bf16.mxu0 0
      %2391 = vmatpush1.bf16.msra.mxu0 %v1999
      %2392 = vmatprep.subr.bf16.mxu0 0
      %2393 = vmatpush1.bf16.msra.mxu0 %v2000
      %2394 = vmatprep.subr.bf16.mxu0 0
      %2395 = vmatpush1.bf16.msra.mxu0 %v2001
      %2396 = vmatprep.subr.bf16.mxu0 0
      %2397 = vmatpush1.bf16.msra.mxu0 %v2002
      %2398 = vmatprep.subr.bf16.mxu0 0
      %2399 = vmatpush1.bf16.msra.mxu0 %v2003
      %2400 = vmatprep.subr.bf16.mxu0 0
      %2401 = vmatpush1.bf16.msra.mxu0 %v2004
      %2402 = vmatprep.subr.bf16.mxu0 0
      %2403 = vmatpush1.bf16.msra.mxu0 %v2005
      %2404 = vmatprep.subr.bf16.mxu0 0
      %2405 = vmatpush1.bf16.msra.mxu0 0
      %2406 = vmatprep.subr.bf16.mxu0 0
      %2407 = vmatpush1.bf16.msra.mxu0 0
      %2408 = vmatprep.subr.bf16.mxu0 0
      %2409 = vmatpush1.bf16.msra.mxu0 0
      %2410 = vmatprep.subr.bf16.mxu0 0
      %2411 = vmatpush1.bf16.msra.mxu0 0
      %2412 = vmatprep.subr.bf16.mxu0 0
      %2413 = vmatpush1.bf16.msra.mxu0 0
      %2414 = vmatprep.subr.bf16.mxu0 0
      %2415 = vmatpush1.bf16.msra.mxu0 0
      %2416 = vmatprep.subr.bf16.mxu0 0
      %2417 = vmatpush1.bf16.msra.mxu0 0
      %2418 = vmatprep.subr.bf16.mxu0 0
      %2419 = vmatpush1.bf16.msra.mxu0 0
      %2420 = vmatprep.mubr.bf16.mxu0 0
      %2421 = vmatmul.mubr.bf16.gmra.mrb[0].mxu0 %v2387
      %v2422 = vpop.f32.mrb[0].mxu0
      %v2423 = vadd.f32 0.0, %v2422
      %v2424 = vpop.f32.mrb[0].mxu0
      %v2425 = vpop.f32.mrb[0].mxu0
      %v2426 = vpop.f32.mrb[0].mxu0
      %2427 = vdwg.mxu0
      %v2428 = vmul.f32 %v2381, %v2381
      %v2429 = vsub.f32 %v2423, %v2428
      %v2430 = vmax.f32 %v2429, 0.0
      %v2431 = vsub.f32 %v2342, %v2381
      %v2432 = vadd.f32 %v2430, 1e-05
      %v2433 = vrsqrt.pop %v2432
      %v2434 = vmul.f32 %v2431, %v2433
      %v2436 = vlaneseq
      %v2437 = vshrl.u32 %v2436, 7
      %v2438 = vsub.s32 0, %v2437
      %v2439 = vrot.slane %v2343, %v2438
      %v2441 = vmul.f32 %v2434, %v2439
      %v2443 = vlaneseq
      %v2444 = vshrl.u32 %v2443, 7
      %v2445 = vsub.s32 0, %v2444
      %v2446 = vrot.slane %v2344, %v2445
      %v2448 = vadd.f32 %v2441, %v2446
      %v2449 = vld [vmem:[%s15] sm:$0xf]
      %v2450 = vld [vmem:[%s15 + $0x4] sm:$0xf]
      %v2451 = vld [vmem:[%s15 + $0x8] sm:$0xf]
      %v2452 = vld [vmem:[%s15 + $0xc] sm:$0xf]
      %v2453 = vld [vmem:[%s15 + $0x10] sm:$0xf]
      %v2454 = vld [vmem:[%s15 + $0x14] sm:$0xf]
      %v2455 = vld [vmem:[%s15 + $0x18] sm:$0xf]
      %v2456 = vld [vmem:[%s15 + $0x1c] sm:$0xf]
      %v2457 = vld [vmem:[%s15 + $0x20] sm:$0xf]
      %v2458 = vld [vmem:[%s15 + $0x24] sm:$0xf]
      %v2459 = vld [vmem:[%s15 + $0x28] sm:$0xf]
      %v2460 = vld [vmem:[%s15 + $0x2c] sm:$0xf]
      %v2461 = vld [vmem:[%s15 + $0x30] sm:$0xf]
      %v2462 = vld [vmem:[%s15 + $0x34] sm:$0xf]
      %v2463 = vld [vmem:[%s15 + $0x38] sm:$0xf]
      %v2464 = vld [vmem:[%s15 + $0x3c] sm:$0xf]
      %v2465 = vpack.c.bf16 %v2448, %v2448
      %v2466 = vld [vmem:[%s16] sm:$0x1]
      %v2468 = vlaneseq
      %v2469 = vshrl.u32 %v2468, 7
      %v2470 = vsub.s32 0, %v2469
      %v2471 = vrot.slane %v2466, %v2470
      %v2489 = vunpack.c.l.b16 %v2449
      %v2490 = vunpack.c.l.b16 %v2450
      %v2491 = vunpack.c.l.b16 %v2451
      %v2492 = vunpack.c.l.b16 %v2452
      %v2493 = vunpack.c.l.b16 %v2453
      %v2494 = vunpack.c.l.b16 %v2454
      %v2495 = vunpack.c.l.b16 %v2455
      %v2496 = vunpack.c.l.b16 %v2456
      %v2497 = vunpack.c.l.b16 %v2457
      %v2498 = vunpack.c.l.b16 %v2458
      %v2499 = vunpack.c.l.b16 %v2459
      %v2500 = vunpack.c.l.b16 %v2460
      %v2501 = vunpack.c.l.b16 %v2461
      %v2502 = vunpack.c.l.b16 %v2462
      %v2503 = vunpack.c.l.b16 %v2463
      %v2504 = vunpack.c.l.b16 %v2464
      %v2505 = vpack.c.b16 %v2490, %v2489
      %v2506 = vpack.c.b16 %v2492, %v2491
      %v2507 = vpack.c.b16 %v2494, %v2493
      %v2508 = vpack.c.b16 %v2496, %v2495
      %v2509 = vpack.c.b16 %v2498, %v2497
      %v2510 = vpack.c.b16 %v2500, %v2499
      %v2511 = vpack.c.b16 %v2502, %v2501
      %v2512 = vpack.c.b16 %v2504, %v2503
      %2521 = vmatprep.subr.bf16.mxu0 0
      %2522 = vmatpush1.bf16.msra.mxu0 %v2505
      %2523 = vmatprep.subr.bf16.mxu0 0
      %2524 = vmatpush1.bf16.msra.mxu0 %v2506
      %2525 = vmatprep.subr.bf16.mxu0 0
      %2526 = vmatpush1.bf16.msra.mxu0 %v2507
      %2527 = vmatprep.subr.bf16.mxu0 0
      %2528 = vmatpush1.bf16.msra.mxu0 %v2508
      %2529 = vmatprep.subr.bf16.mxu0 0
      %2530 = vmatpush1.bf16.msra.mxu0 %v2509
      %2531 = vmatprep.subr.bf16.mxu0 0
      %2532 = vmatpush1.bf16.msra.mxu0 %v2510
      %2533 = vmatprep.subr.bf16.mxu0 0
      %2534 = vmatpush1.bf16.msra.mxu0 %v2511
      %2535 = vmatprep.subr.bf16.mxu0 0
      %2536 = vmatpush1.bf16.msra.mxu0 %v2512
      %2537 = vmatprep.subr.bf16.mxu0 0
      %2538 = vmatpush1.bf16.msra.mxu0 0
      %2539 = vmatprep.subr.bf16.mxu0 0
      %2540 = vmatpush1.bf16.msra.mxu0 0
      %2541 = vmatprep.subr.bf16.mxu0 0
      %2542 = vmatpush1.bf16.msra.mxu0 0
      %2543 = vmatprep.subr.bf16.mxu0 0
      %2544 = vmatpush1.bf16.msra.mxu0 0
      %2545 = vmatprep.subr.bf16.mxu0 0
      %2546 = vmatpush1.bf16.msra.mxu0 0
      %2547 = vmatprep.subr.bf16.mxu0 0
      %2548 = vmatpush1.bf16.msra.mxu0 0
      %2549 = vmatprep.subr.bf16.mxu0 0
      %2550 = vmatpush1.bf16.msra.mxu0 0
      %2551 = vmatprep.subr.bf16.mxu0 0
      %2552 = vmatpush1.bf16.msra.mxu0 0
      %2553 = vmatprep.mubr.bf16.mxu0 0
      %2554 = vmatmul.mubr.bf16.gmra.mrb[0].mxu0 %v2465
      %v2555 = vpop.f32.mrb[0].mxu0
      %v2556 = vadd.f32 %v2471, %v2555
      %v2557 = vpop.f32.mrb[0].mxu0
      %v2558 = vpop.f32.mrb[0].mxu0
      %v2559 = vpop.f32.mrb[0].mxu0
      %2560 = vdwg.mxu0
      %2561 = vst [vmem:[%s543] sm:$0xff] %v2556
      %p2562 = scmp.lt.s32.totalorder %s28, 1
      %s2563 = scalar_select %p2562, %s28, 1
      %s2564 = smul.addr %s2563, 8
      %s2565 = scalar_lea.vmem %s17, %s2564
      // Predicated region
      $region89: #{row_encoder_forward.1} parent=87 // pred_check
        %p2566 = pneg %p408
      $region90: #{row_encoder_forward.1} parent=87 // pred_check_branch
        %2568 = sbr.rel (%p2566) target = $region92
      $region91: #{row_encoder_forward.1} parent=87 // pred_region
        _
      $region92: #{row_encoder_forward.1} parent=87 // pred_fallthru
        _
    $region88: #{row_encoder_forward.1} parent=5 // pred_fallthru
      _
    %p2569 = scmp.le.s32.totalorder 2, %s23
    // Predicated region
    $region93: #{row_encoder_forward.1} parent=5 // pred_check
      %p2570 = pneg %p2569
    $region94: #{row_encoder_forward.1} parent=5 // pred_check_branch
      %2572 = sbr.rel (%p2570) target = $region96
    $region95: #{row_encoder_forward.1} parent=5 // pred_region
      %s2573 = ssub.s32 %s23, 2
      // Predicated region
      $region97: #{row_encoder_forward.1} parent=95 // pred_check
        %p2574 = pneg %p414
      $region98: #{row_encoder_forward.1} parent=95 // pred_check_branch
        %2576 = sbr.rel (%p2574) target = $region100
      $region99: #{row_encoder_forward.1} parent=95 // pred_region
        %p2577 = scmp.lt.s32.totalorder %s29, 1
        %s2578 = scalar_select %p2577, %s29, 1
        %s2579 = smul.addr %s2578, 8
        %s2580 = scalar_lea.vmem %s17, %s2579
      $region100: #{row_encoder_forward.1} parent=95 // pred_fallthru
        _
    $region96: #{row_encoder_forward.1} parent=5 // pred_fallthru
      _
  $region6: #{row_encoder_forward.1} parent=0 // loop_footer
    %s27 = sadd.s32 1, %s23
  $region7: #{row_encoder_forward.1} parent=0 // loop_footer_branch
    %22 = sbr.rel target = $region3
  $region8: #{row_encoder_forward.1} parent=0 // loop_exit
    _

</llo_original>
